<compile_context>
chip_gen: v7x
topology: tpu7x:2x2x1
jax: 0.10.0
libtpu: 0.0.40
codegen_flags: <defaults>
</compile_context>

<pallas_src>
import numpy as np

import jax
import jax.numpy as jnp
from jax.experimental import pallas as pl
from jax.experimental.pallas import tpu as pltpu


# --------------------------- architecture constants ---------------------------

IMG = 16                 # input spatial size
C_IN = 4                 # input channels
C1 = 8                   # conv1 output channels
C2 = 16                  # conv2 output channels
P1 = IMG // 2            # spatial size after pool1 (8)
P2 = P1 // 2             # spatial size after pool2 (4)
FEAT = C2 * P2 * P2      # flattened feature size (256)
LANES = 128

NIMG = 8                 # images per grid step (conv1 dot: M = 2*NIMG*P1 = 128)


# ----------------------- structured weight construction -----------------------
# (plain-JAX / numpy glue on tiny weight tensors, executed in the wrapper)

def _conv_toeplitz(w_hwio, w_out, k_lanes):
    """Banded ('same' along W) per-kh conv matrices for the (row, q*Cin+ci) layout.

    Returns G of shape (kh, k_lanes, w_out*Cout) with
      G[kh, q*Cin+ci, w*Cout+co] = w_hwio[kh, q-w, ci, co]   (0 <= q-w < kw)
    so that conv output at height h is  sum_kh  x_pad[h+kh, :] @ G[kh].
    """
    kh, kw, cin, cout = w_hwio.shape
    w_in = w_out + kw - 1                                   # padded width
    q = jnp.arange(w_in)[:, None]
    w = jnp.arange(w_out)[None, :]
    dw = q - w
    valid = (dw >= 0) & (dw < kw)
    g = w_hwio[:, jnp.clip(dw, 0, kw - 1), :, :]            # (kh, w_in, w_out, cin, cout)
    g = g * valid[None, :, :, None, None]
    g = jnp.transpose(g, (0, 1, 3, 2, 4)).reshape(kh, w_in * cin, w_out * cout)
    return jnp.pad(g, ((0, 0), (0, k_lanes - w_in * cin), (0, 0)))


def _wpool_select(w_in, c, pad):
    """(128,128) 0/1 matrices taking lane (w*c+co) -> ((w//2)+pad)*c+co for
    even / odd w: fuses the W-direction 2x2 max-pool with the zero columns the
    next 'same' conv needs."""
    w_out = w_in // 2
    wo = np.arange(w_out)[:, None]
    cc = np.arange(c)[None, :]
    cols = ((wo + pad) * c + cc).reshape(-1)
    rows_e = ((2 * wo) * c + cc).reshape(-1)
    rows_o = ((2 * wo + 1) * c + cc).reshape(-1)
    se = np.zeros((LANES, LANES), np.float32)
    so = np.zeros((LANES, LANES), np.float32)
    se[rows_e, cols] = 1.0
    so[rows_o, cols] = 1.0
    return jnp.asarray(se), jnp.asarray(so)


def _conv2_row_select(nimg):
    """(4*nimg*P2, nimg*P1) 0/1 row selection.  Block d (d-1 in {-1,0,1,2}),
    row (i, ho2) picks pooled-conv1 row i*P1 + 2*ho2 + (d-1); rows that would
    read outside [0, P1) stay zero (= conv2's H zero padding)."""
    m2 = nimg * P2
    s = np.zeros((4 * m2, nimg * P1), np.float32)
    for d_blk in range(4):
        d = d_blk - 1
        for i in range(nimg):
            for ho2 in range(P2):
                src = 2 * ho2 + d
                if 0 <= src < P1:
                    s[d_blk * m2 + i * P2 + ho2, i * P1 + src] = 1.0
    return jnp.asarray(s)


def _head_row_select(nimg):
    """(4*nimg, nimg*P2) 0/1 selection: row ho2*nimg + i picks pooled row
    i*P2 + ho2 (per-image gather of the 4 feature rows)."""
    s = np.zeros((4 * nimg, nimg * P2), np.float32)
    for ho2 in range(P2):
        for i in range(nimg):
            s[ho2 * nimg + i, i * P2 + ho2] = 1.0
    return jnp.asarray(s)


def _head_w1_parts(w1cat):
    """Fold the PyTorch NCHW flatten (feat index co*16 + ho2*4 + wo2) into the
    merged layer-1 head weights: W1P[ho2, wo2*C2+co, :] = w1cat[flat_idx, :]."""
    ho2 = np.arange(P2)[:, None, None]
    wo2 = np.arange(P2)[None, :, None]
    co = np.arange(C2)[None, None, :]
    src = co * (P2 * P2) + ho2 * P2 + wo2                   # (4, 4, 16)
    parts = w1cat[src]                                      # (4, 4, 16, 128)
    parts = parts.reshape(P2, P2 * C2, LANES)               # row = wo2*16 + co
    return jnp.pad(parts, ((0, 0), (0, LANES - P2 * C2), (0, 0)))


def _build_constants(params):
    """Pack every structured matrix the kernel needs into 5 arrays."""
    # conv Toeplitz stacks (K padded to 128 lanes; output lanes are exactly 128)
    t1 = _conv_toeplitz(params["conv1_w"], w_out=IMG, k_lanes=LANES)    # (3,128,128)
    t1s = t1.reshape(3 * LANES, LANES).astype(jnp.bfloat16)             # (384,128)
    t2 = _conv_toeplitz(params["conv2_w"], w_out=P1, k_lanes=LANES)     # (3,128,128)

    sw1e, sw1o = _wpool_select(IMG, C1, pad=1)                          # lanes -> conv2 layout
    sw2e, sw2o = _wpool_select(P1, C2, pad=0)

    # merged heads: layer-1 = [lp_w1 | dc_w1] with the flatten folded in,
    # layer-2 = block-diagonal (lp -> lanes 0..9, dc -> lanes 64..65).
    w1cat = jnp.concatenate([params["lp_w1"], params["dc_w1"]], axis=1)  # (256,128)
    w1p = _head_w1_parts(w1cat)                                          # (4,128,128)
    w2b = jnp.zeros((LANES, LANES), jnp.float32)
    w2b = w2b.at[0:64, 0:10].set(params["lp_w2"])
    w2b = w2b.at[64:128, 64:66].set(params["dc_w2"])

    cst = jnp.stack([sw1e, sw1o, t2[0], t2[1], t2[2], sw2e, sw2o,
                     w1p[0], w1p[1], w1p[2], w1p[3], w2b]).astype(jnp.bfloat16)

    sel2 = _conv2_row_select(NIMG).astype(jnp.bfloat16)                  # (128, 64)
    selh = _head_row_select(NIMG).astype(jnp.bfloat16)                   # (32, 32)

    # bias tiles (zero at every padding lane so relu(0+0)=0 keeps pads exact)
    b1t = jnp.zeros((LANES,), jnp.float32).at[C1:(P1 + 1) * C1].set(
        jnp.tile(params["conv1_b"], P1))
    b2t = jnp.zeros((LANES,), jnp.float32).at[0:P2 * C2].set(
        jnp.tile(params["conv2_b"], P2))
    bh1 = jnp.concatenate([params["lp_b1"], params["dc_b1"]])
    bh2 = (jnp.zeros((LANES,), jnp.float32)
           .at[0:10].set(params["lp_b2"]).at[64:66].set(params["dc_b2"]))
    bias = jnp.stack([b1t, b2t, bh1, bh2])[:, None, :]                   # (4,1,128)

    return t1s, cst, sel2, selh, bias


def _prepare_conv1_operand(x_nchw, nb_pad):
    """Layout plumbing only: zero-pad, gather the three kh-shifted padded rows
    for each even/odd conv1 output height, stack them along the lane axis
    (kh*128 + q*C_IN + ci) and stack images/heights along sublanes so conv1 is
    a single (2*NIMG*P1, 384) @ (384, 128) MXU dot per grid step."""
    nb = x_nchw.shape[0]
    x = jnp.transpose(x_nchw, (0, 2, 3, 1)).astype(jnp.float32)          # NHWC
    x = jnp.pad(x, ((0, nb_pad - nb), (1, 1), (1, 1), (0, 0)))           # (nb_pad,18,18,4)
    x = x.reshape(nb_pad, IMG + 2, (IMG + 2) * C_IN)
    x = jnp.pad(x, ((0, 0), (0, 0), (0, LANES - (IMG + 2) * C_IN)))      # lane-pad -> 128
    idx = 2 * np.arange(P1)[:, None] + np.arange(3)[None, :]             # 2*ho + kh
    xe = x[:, idx, :].reshape(nb_pad, P1, 3 * LANES)                     # even heights
    xo = x[:, idx + 1, :].reshape(nb_pad, P1, 3 * LANES)                 # odd heights
    g = nb_pad // NIMG
    xe = xe.reshape(g, NIMG * P1, 3 * LANES)
    xo = xo.reshape(g, NIMG * P1, 3 * LANES)
    return jnp.concatenate([xe, xo], axis=1).reshape(g * 2 * NIMG * P1, 3 * LANES)


# ------------------------------- Pallas kernel ---------------------------------

def _damodel_kernel(xeo_ref, t1s_ref, cst_ref, sel2_ref, selh_ref, bias_ref, out_ref):
    """Fused CNN feature extractor + both MLP heads for NIMG images."""
    f32, bf16 = jnp.float32, jnp.bfloat16
    m1 = NIMG * P1          # 64 rows after H-pool1
    m2 = NIMG * P2          # 32 rows after H-pool2

    # conv1: one stacked-K MXU dot for all even+odd output heights of all images
    ceo = jnp.dot(xeo_ref[...].astype(bf16), t1s_ref[...], preferred_element_type=f32)
    hp1 = jnp.maximum(ceo[:m1, :], ceo[m1:, :])                     # H-pool (pre-bias)

    # W-pool1 (+ zero columns for conv2) via 0/1 selection dots, then bias+ReLU
    hp1b = hp1.astype(bf16)
    wp1 = jnp.maximum(jnp.dot(hp1b, cst_ref[0], preferred_element_type=f32),
                      jnp.dot(hp1b, cst_ref[1], preferred_element_type=f32))
    y1 = jnp.maximum(wp1 + bias_ref[0], 0.0)                        # (m1, 128)

    # conv2: one row-shift selection dot + banded Toeplitz dots, fused H-pool2
    ysel = jnp.dot(sel2_ref[...], y1.astype(bf16),
                   preferred_element_type=f32).astype(bf16)         # (4*m2, 128), exact
    ya, yb, yc, yd = (ysel[0:m2], ysel[m2:2 * m2],
                      ysel[2 * m2:3 * m2], ysel[3 * m2:4 * m2])
    e2 = jnp.dot(ya, cst_ref[2], preferred_element_type=f32)        # conv2 @ even h2
    e2 = e2 + jnp.dot(yb, cst_ref[3], preferred_element_type=f32)
    e2 = e2 + jnp.dot(yc, cst_ref[4], preferred_element_type=f32)
    o2 = jnp.dot(yb, cst_ref[2], preferred_element_type=f32)        # conv2 @ odd h2
    o2 = o2 + jnp.dot(yc, cst_ref[3], preferred_element_type=f32)
    o2 = o2 + jnp.dot(yd, cst_ref[4], preferred_element_type=f32)
    hp2 = jnp.maximum(e2, o2)                                       # (m2, 128)

    # W-pool2, bias + ReLU (the NCHW flatten is folded into the head weights)
    hp2b = hp2.astype(bf16)
    wp2 = jnp.maximum(jnp.dot(hp2b, cst_ref[5], preferred_element_type=f32),
                      jnp.dot(hp2b, cst_ref[6], preferred_element_type=f32))
    y2 = jnp.maximum(wp2 + bias_ref[1], 0.0)                        # (m2, 128)

    # fused heads: per-image row gather (one dot), merged 256->128 layer-1 and
    # block-diagonal 128->(10|2) layer-2 -> lane-dense (NIMG, 128) output block
    zall = jnp.dot(selh_ref[...], y2.astype(bf16),
                   preferred_element_type=f32).astype(bf16)         # (4*NIMG, 128), exact
    h = jnp.dot(zall[0:NIMG], cst_ref[7], preferred_element_type=f32)
    h = h + jnp.dot(zall[NIMG:2 * NIMG], cst_ref[8], preferred_element_type=f32)
    h = h + jnp.dot(zall[2 * NIMG:3 * NIMG], cst_ref[9], preferred_element_type=f32)
    h = h + jnp.dot(zall[3 * NIMG:4 * NIMG], cst_ref[10], preferred_element_type=f32)
    h = jnp.maximum(h + bias_ref[2], 0.0)
    out_ref[...] = (jnp.dot(h.astype(bf16), cst_ref[11],
                            preferred_element_type=f32) + bias_ref[3])


# --------------------------------- wrappers ------------------------------------

def _fused_forward(params, mixed_nchw):
    """Whole DAModel forward on the concatenated (source|target) batch.
    Returns lane-dense logits: lanes 0..9 = label predictor, 64..65 = domain."""
    nb = mixed_nchw.shape[0]
    nb_pad = ((nb + NIMG - 1) // NIMG) * NIMG
    g = nb_pad // NIMG

    xeo = _prepare_conv1_operand(mixed_nchw, nb_pad)          # (g*2*NIMG*P1, 384)
    t1s, cst, sel2, selh, bias = _build_constants(params)

    m_blk = 2 * NIMG * P1                                     # 128
    logits = pl.pallas_call(
        _damodel_kernel,
        out_shape=jax.ShapeDtypeStruct((nb_pad, LANES), jnp.float32),
        grid=(g,),
        in_specs=[
            pl.BlockSpec((m_blk, 3 * LANES), lambda i: (i, 0)),       # images
            pl.BlockSpec((3 * LANES, LANES), lambda i: (0, 0)),       # conv1 Toeplitz
            pl.BlockSpec(cst.shape, lambda i: (0, 0, 0)),             # packed bf16 consts
            pl.BlockSpec(sel2.shape, lambda i: (0, 0)),               # conv2 row select
            pl.BlockSpec(selh.shape, lambda i: (0, 0)),               # head row select
            pl.BlockSpec(bias.shape, lambda i: (0, 0, 0)),            # packed f32 biases
        ],
        out_specs=pl.BlockSpec((NIMG, LANES), lambda i: (i, 0)),
        compiler_params=pltpu.CompilerParams(
            dimension_semantics=("parallel",)),
    )(xeo, t1s, cst, sel2, selh, bias)
    return logits                                             # (nb_pad, 128)


def da_model_forward(params, source_data, target_data, alpha=1.0):
    b = source_data.shape[0]
    # Shared-weight feature extractor (and both heads) run ONCE on the
    # concatenated batch inside a single fused kernel.
    mixed = jnp.concatenate([source_data, target_data], axis=0)       # (2B, C, H, W)
    # ReverseLayerF.apply is the identity in the forward pass (alpha only
    # scales the reversed gradient in backward).
    # TODO(synk): attach a jax.custom_vjp (-alpha * grad) if training-time
    # gradient reversal is needed.
    del alpha
    logits = _fused_forward(params, mixed)
    sa_logits = logits[:b, 0:10]              # label predictor on source only
    da_logits = logits[:2 * b, 64:66]         # domain classifier on source+target
    return sa_logits, da_logits


# --------------------------------- params --------------------------------------

def init_params(key):
    ks = jax.random.split(key, 6)

    def dense(k, fan_in, shape):
        return (jax.random.normal(k, shape, jnp.float32)
                * (1.0 / jnp.sqrt(jnp.float32(fan_in))))

    return {
        # feature extractor: conv3x3(4->8)-relu-pool, conv3x3(8->16)-relu-pool (HWIO)
        "conv1_w": dense(ks[0], 3 * 3 * C_IN, (3, 3, C_IN, C1)),
        "conv1_b": jnp.zeros((C1,), jnp.float32),
        "conv2_w": dense(ks[1], 3 * 3 * C1, (3, 3, C1, C2)),
        "conv2_b": jnp.zeros((C2,), jnp.float32),
        # label predictor: 256 -> 64 -> 10
        "lp_w1": dense(ks[2], FEAT, (FEAT, 64)),
        "lp_b1": jnp.zeros((64,), jnp.float32),
        "lp_w2": dense(ks[3], 64, (64, 10)),
        "lp_b2": jnp.zeros((10,), jnp.float32),
        # domain classifier: 256 -> 64 -> 2
        "dc_w1": dense(ks[4], FEAT, (FEAT, 64)),
        "dc_b1": jnp.zeros((64,), jnp.float32),
        "dc_w2": dense(ks[5], 64, (64, 2)),
        "dc_b2": jnp.zeros((2,), jnp.float32),
    }


# ---------------------------- plain-JAX reference ------------------------------

def _ref_features(params, x_nchw):
    x = jnp.transpose(x_nchw, (0, 2, 3, 1)).astype(jnp.float32)
    y = jax.lax.conv_general_dilated(x, params["conv1_w"], (1, 1), "SAME",
                                     dimension_numbers=("NHWC", "HWIO", "NHWC"))
    y = jax.nn.relu(y + params["conv1_b"])
    n, h, w, c = y.shape
    y = y.reshape(n, h // 2, 2, w // 2, 2, c).max(axis=(2, 4))
    z = jax.lax.conv_general_dilated(y, params["conv2_w"], (1, 1), "SAME",
                                     dimension_numbers=("NHWC", "HWIO", "NHWC"))
    z = jax.nn.relu(z + params["conv2_b"])
    n, h, w, c = z.shape
    z = z.reshape(n, h // 2, 2, w // 2, 2, c).max(axis=(2, 4))
    return jnp.transpose(z, (0, 3, 1, 2)).reshape(n, -1)     # PyTorch NCHW flatten


def _reference_forward(params, source, target):
    s = _ref_features(params, source)
    t = _ref_features(params, target)
    sa = (jnp.maximum(s @ params["lp_w1"] + params["lp_b1"], 0.0)
          @ params["lp_w2"] + params["lp_b2"])
    mixed = jnp.concatenate([s, t], axis=0)
    da = (jnp.maximum(mixed @ params["dc_w1"] + params["dc_b1"], 0.0)
          @ params["dc_w2"] + params["dc_b2"])
    return sa, da


# ----------------------------------- main ---------------------------------------

if __name__ == "__main__":
    key = jax.random.PRNGKey(0)
    k_src, k_tgt, k_par = jax.random.split(key, 3)

    B = 2
    source_data = jax.random.normal(k_src, (B, C_IN, IMG, IMG), jnp.float32)
    target_data = jax.random.normal(k_tgt, (B, C_IN, IMG, IMG), jnp.float32)
    params = init_params(k_par)

    fwd = jax.jit(da_model_forward)
    sa_logits, da_logits = fwd(params, source_data, target_data)
    jax.block_until_ready((sa_logits, da_logits))

    assert sa_logits.shape == (B, 10)
    assert da_logits.shape == (2 * B, 2)
    assert bool(jnp.all(jnp.isfinite(sa_logits)))
    assert bool(jnp.all(jnp.isfinite(da_logits)))

    # correctness check against a plain-JAX reference (loose tolerance: the
    # kernel uses bf16 matmul operands with f32 accumulation)
    ref_sa, ref_da = _reference_forward(params, source_data, target_data)
    np.testing.assert_allclose(np.asarray(sa_logits), np.asarray(ref_sa),
                               rtol=0.1, atol=0.25)
    np.testing.assert_allclose(np.asarray(da_logits), np.asarray(ref_da),
                               rtol=0.1, atol=0.25)

    print("KERNEL_OK")
</pallas_src>

<mosaic_0001>
module attributes {stable_mosaic.version = 11 : i64} {
  func.func @_damodel_kernel(%arg0: i32, %arg1: memref<128x384xf32, #tpu.memory_space<vmem>>, %arg2: memref<384x128xbf16, #tpu.memory_space<vmem>>, %arg3: memref<12x128x128xbf16, #tpu.memory_space<vmem>>, %arg4: memref<128x64xbf16, #tpu.memory_space<vmem>>, %arg5: memref<32x32xbf16, #tpu.memory_space<vmem>>, %arg6: memref<4x1x128xf32, #tpu.memory_space<vmem>>, %arg7: memref<8x128xf32, #tpu.memory_space<vmem>>) attributes {dimension_semantics = [#tpu.dimension_semantics<parallel>], iteration_bounds = array<i64: 1>, scalar_prefetch = 0 : i64, scratch_operands = 0 : i64, tpu.core_type = #tpu.core_type<tc>, window_params = [{transform_indices = @transform_0, window_bounds = array<i64: 128, 384>}, {pipeline_mode = #tpu.pipeline_mode<synchronous>, transform_indices = @transform_1, window_bounds = array<i64: 384, 128>}, {pipeline_mode = #tpu.pipeline_mode<synchronous>, transform_indices = @transform_2, window_bounds = array<i64: 12, 128, 128>}, {pipeline_mode = #tpu.pipeline_mode<synchronous>, transform_indices = @transform_3, window_bounds = array<i64: 128, 64>}, {pipeline_mode = #tpu.pipeline_mode<synchronous>, transform_indices = @transform_4, window_bounds = array<i64: 32, 32>}, {pipeline_mode = #tpu.pipeline_mode<synchronous>, transform_indices = @transform_5, window_bounds = array<i64: 4, 1, 128>}, {transform_indices = @transform_6, window_bounds = array<i64: 8, 128>}]} {
    %c0 = arith.constant 0 : index
    %c0_0 = arith.constant 0 : index
    %0 = vector.load %arg1[%c0, %c0_0] : memref<128x384xf32, #tpu.memory_space<vmem>>, vector<128x384xf32>
    %1 = arith.truncf %0 : vector<128x384xf32> to vector<128x384xbf16>
    %c0_1 = arith.constant 0 : index
    %c0_2 = arith.constant 0 : index
    %2 = vector.load %arg2[%c0_1, %c0_2] : memref<384x128xbf16, #tpu.memory_space<vmem>>, vector<384x128xbf16>
    %cst = arith.constant dense<0.000000e+00> : vector<128x128xf32>
    %3 = tpu.matmul %1, %2, %cst {dimension_numbers = #tpu.dot_dimension_numbers<[1], [0], [0], [1], [0, 0, 1, 1], [], []>} : vector<128x384xbf16>, vector<384x128xbf16>, vector<128x128xf32> -> vector<128x128xf32>
    %4 = vector.extract_strided_slice %3 {offsets = [0, 0], sizes = [64, 128], strides = [1, 1]} : vector<128x128xf32> to vector<64x128xf32>
    %5 = vector.extract_strided_slice %3 {offsets = [64, 0], sizes = [64, 128], strides = [1, 1]} : vector<128x128xf32> to vector<64x128xf32>
    %6 = arith.maximumf %4, %5 : vector<64x128xf32>
    %7 = arith.truncf %6 : vector<64x128xf32> to vector<64x128xbf16>
    %c0_3 = arith.constant 0 : index
    %c0_4 = arith.constant 0 : index
    %c0_5 = arith.constant 0 : index
    %8 = vector.load %arg3[%c0_3, %c0_4, %c0_5] : memref<12x128x128xbf16, #tpu.memory_space<vmem>>, vector<1x128x128xbf16>
    %9 = vector.shape_cast %8 : vector<1x128x128xbf16> to vector<128x128xbf16>
    %cst_6 = arith.constant dense<0.000000e+00> : vector<64x128xf32>
    %10 = tpu.matmul %7, %9, %cst_6 {dimension_numbers = #tpu.dot_dimension_numbers<[1], [0], [0], [1], [0, 0, 1, 1], [], []>} : vector<64x128xbf16>, vector<128x128xbf16>, vector<64x128xf32> -> vector<64x128xf32>
    %c1 = arith.constant 1 : index
    %c0_7 = arith.constant 0 : index
    %c0_8 = arith.constant 0 : index
    %11 = vector.load %arg3[%c1, %c0_7, %c0_8] : memref<12x128x128xbf16, #tpu.memory_space<vmem>>, vector<1x128x128xbf16>
    %12 = vector.shape_cast %11 : vector<1x128x128xbf16> to vector<128x128xbf16>
    %cst_9 = arith.constant dense<0.000000e+00> : vector<64x128xf32>
    %13 = tpu.matmul %7, %12, %cst_9 {dimension_numbers = #tpu.dot_dimension_numbers<[1], [0], [0], [1], [0, 0, 1, 1], [], []>} : vector<64x128xbf16>, vector<128x128xbf16>, vector<64x128xf32> -> vector<64x128xf32>
    %14 = arith.maximumf %10, %13 : vector<64x128xf32>
    %c0_10 = arith.constant 0 : index
    %c0_11 = arith.constant 0 : index
    %c0_12 = arith.constant 0 : index
    %15 = vector.load %arg6[%c0_10, %c0_11, %c0_12] : memref<4x1x128xf32, #tpu.memory_space<vmem>>, vector<1x1x128xf32>
    %16 = vector.shape_cast %15 : vector<1x1x128xf32> to vector<1x128xf32>
    %17 = vector.broadcast %16 : vector<1x128xf32> to vector<64x128xf32>
    %18 = arith.addf %14, %17 : vector<64x128xf32>
    %cst_13 = arith.constant 0.000000e+00 : f32
    %19 = vector.broadcast %cst_13 : f32 to vector<64x128xf32>
    %20 = arith.maximumf %18, %19 : vector<64x128xf32>
    %c0_14 = arith.constant 0 : index
    %c0_15 = arith.constant 0 : index
    %21 = vector.load %arg4[%c0_14, %c0_15] : memref<128x64xbf16, #tpu.memory_space<vmem>>, vector<128x64xbf16>
    %22 = arith.truncf %20 : vector<64x128xf32> to vector<64x128xbf16>
    %cst_16 = arith.constant dense<0.000000e+00> : vector<128x128xf32>
    %23 = tpu.matmul %21, %22, %cst_16 {dimension_numbers = #tpu.dot_dimension_numbers<[1], [0], [0], [1], [0, 0, 1, 1], [], []>} : vector<128x64xbf16>, vector<64x128xbf16>, vector<128x128xf32> -> vector<128x128xf32>
    %24 = arith.truncf %23 : vector<128x128xf32> to vector<128x128xbf16>
    %25 = vector.extract_strided_slice %24 {offsets = [0, 0], sizes = [32, 128], strides = [1, 1]} : vector<128x128xbf16> to vector<32x128xbf16>
    %26 = vector.extract_strided_slice %24 {offsets = [32, 0], sizes = [32, 128], strides = [1, 1]} : vector<128x128xbf16> to vector<32x128xbf16>
    %27 = vector.extract_strided_slice %24 {offsets = [64, 0], sizes = [32, 128], strides = [1, 1]} : vector<128x128xbf16> to vector<32x128xbf16>
    %28 = vector.extract_strided_slice %24 {offsets = [96, 0], sizes = [32, 128], strides = [1, 1]} : vector<128x128xbf16> to vector<32x128xbf16>
    %c2 = arith.constant 2 : index
    %c0_17 = arith.constant 0 : index
    %c0_18 = arith.constant 0 : index
    %29 = vector.load %arg3[%c2, %c0_17, %c0_18] : memref<12x128x128xbf16, #tpu.memory_space<vmem>>, vector<1x128x128xbf16>
    %30 = vector.shape_cast %29 : vector<1x128x128xbf16> to vector<128x128xbf16>
    %cst_19 = arith.constant dense<0.000000e+00> : vector<32x128xf32>
    %31 = tpu.matmul %25, %30, %cst_19 {dimension_numbers = #tpu.dot_dimension_numbers<[1], [0], [0], [1], [0, 0, 1, 1], [], []>} : vector<32x128xbf16>, vector<128x128xbf16>, vector<32x128xf32> -> vector<32x128xf32>
    %c3 = arith.constant 3 : index
    %c0_20 = arith.constant 0 : index
    %c0_21 = arith.constant 0 : index
    %32 = vector.load %arg3[%c3, %c0_20, %c0_21] : memref<12x128x128xbf16, #tpu.memory_space<vmem>>, vector<1x128x128xbf16>
    %33 = vector.shape_cast %32 : vector<1x128x128xbf16> to vector<128x128xbf16>
    %cst_22 = arith.constant dense<0.000000e+00> : vector<32x128xf32>
    %34 = tpu.matmul %26, %33, %cst_22 {dimension_numbers = #tpu.dot_dimension_numbers<[1], [0], [0], [1], [0, 0, 1, 1], [], []>} : vector<32x128xbf16>, vector<128x128xbf16>, vector<32x128xf32> -> vector<32x128xf32>
    %35 = arith.addf %31, %34 : vector<32x128xf32>
    %c4 = arith.constant 4 : index
    %c0_23 = arith.constant 0 : index
    %c0_24 = arith.constant 0 : index
    %36 = vector.load %arg3[%c4, %c0_23, %c0_24] : memref<12x128x128xbf16, #tpu.memory_space<vmem>>, vector<1x128x128xbf16>
    %37 = vector.shape_cast %36 : vector<1x128x128xbf16> to vector<128x128xbf16>
    %cst_25 = arith.constant dense<0.000000e+00> : vector<32x128xf32>
    %38 = tpu.matmul %27, %37, %cst_25 {dimension_numbers = #tpu.dot_dimension_numbers<[1], [0], [0], [1], [0, 0, 1, 1], [], []>} : vector<32x128xbf16>, vector<128x128xbf16>, vector<32x128xf32> -> vector<32x128xf32>
    %39 = arith.addf %35, %38 : vector<32x128xf32>
    %c2_26 = arith.constant 2 : index
    %c0_27 = arith.constant 0 : index
    %c0_28 = arith.constant 0 : index
    %40 = vector.load %arg3[%c2_26, %c0_27, %c0_28] : memref<12x128x128xbf16, #tpu.memory_space<vmem>>, vector<1x128x128xbf16>
    %41 = vector.shape_cast %40 : vector<1x128x128xbf16> to vector<128x128xbf16>
    %cst_29 = arith.constant dense<0.000000e+00> : vector<32x128xf32>
    %42 = tpu.matmul %26, %41, %cst_29 {dimension_numbers = #tpu.dot_dimension_numbers<[1], [0], [0], [1], [0, 0, 1, 1], [], []>} : vector<32x128xbf16>, vector<128x128xbf16>, vector<32x128xf32> -> vector<32x128xf32>
    %c3_30 = arith.constant 3 : index
    %c0_31 = arith.constant 0 : index
    %c0_32 = arith.constant 0 : index
    %43 = vector.load %arg3[%c3_30, %c0_31, %c0_32] : memref<12x128x128xbf16, #tpu.memory_space<vmem>>, vector<1x128x128xbf16>
    %44 = vector.shape_cast %43 : vector<1x128x128xbf16> to vector<128x128xbf16>
    %cst_33 = arith.constant dense<0.000000e+00> : vector<32x128xf32>
    %45 = tpu.matmul %27, %44, %cst_33 {dimension_numbers = #tpu.dot_dimension_numbers<[1], [0], [0], [1], [0, 0, 1, 1], [], []>} : vector<32x128xbf16>, vector<128x128xbf16>, vector<32x128xf32> -> vector<32x128xf32>
    %46 = arith.addf %42, %45 : vector<32x128xf32>
    %c4_34 = arith.constant 4 : index
    %c0_35 = arith.constant 0 : index
    %c0_36 = arith.constant 0 : index
    %47 = vector.load %arg3[%c4_34, %c0_35, %c0_36] : memref<12x128x128xbf16, #tpu.memory_space<vmem>>, vector<1x128x128xbf16>
    %48 = vector.shape_cast %47 : vector<1x128x128xbf16> to vector<128x128xbf16>
    %cst_37 = arith.constant dense<0.000000e+00> : vector<32x128xf32>
    %49 = tpu.matmul %28, %48, %cst_37 {dimension_numbers = #tpu.dot_dimension_numbers<[1], [0], [0], [1], [0, 0, 1, 1], [], []>} : vector<32x128xbf16>, vector<128x128xbf16>, vector<32x128xf32> -> vector<32x128xf32>
    %50 = arith.addf %46, %49 : vector<32x128xf32>
    %51 = arith.maximumf %39, %50 : vector<32x128xf32>
    %52 = arith.truncf %51 : vector<32x128xf32> to vector<32x128xbf16>
    %c5 = arith.constant 5 : index
    %c0_38 = arith.constant 0 : index
    %c0_39 = arith.constant 0 : index
    %53 = vector.load %arg3[%c5, %c0_38, %c0_39] : memref<12x128x128xbf16, #tpu.memory_space<vmem>>, vector<1x128x128xbf16>
    %54 = vector.shape_cast %53 : vector<1x128x128xbf16> to vector<128x128xbf16>
    %cst_40 = arith.constant dense<0.000000e+00> : vector<32x128xf32>
    %55 = tpu.matmul %52, %54, %cst_40 {dimension_numbers = #tpu.dot_dimension_numbers<[1], [0], [0], [1], [0, 0, 1, 1], [], []>} : vector<32x128xbf16>, vector<128x128xbf16>, vector<32x128xf32> -> vector<32x128xf32>
    %c6 = arith.constant 6 : index
    %c0_41 = arith.constant 0 : index
    %c0_42 = arith.constant 0 : index
    %56 = vector.load %arg3[%c6, %c0_41, %c0_42] : memref<12x128x128xbf16, #tpu.memory_space<vmem>>, vector<1x128x128xbf16>
    %57 = vector.shape_cast %56 : vector<1x128x128xbf16> to vector<128x128xbf16>
    %cst_43 = arith.constant dense<0.000000e+00> : vector<32x128xf32>
    %58 = tpu.matmul %52, %57, %cst_43 {dimension_numbers = #tpu.dot_dimension_numbers<[1], [0], [0], [1], [0, 0, 1, 1], [], []>} : vector<32x128xbf16>, vector<128x128xbf16>, vector<32x128xf32> -> vector<32x128xf32>
    %59 = arith.maximumf %55, %58 : vector<32x128xf32>
    %c1_44 = arith.constant 1 : index
    %c0_45 = arith.constant 0 : index
    %c0_46 = arith.constant 0 : index
    %60 = vector.load %arg6[%c1_44, %c0_45, %c0_46] : memref<4x1x128xf32, #tpu.memory_space<vmem>>, vector<1x1x128xf32>
    %61 = vector.shape_cast %60 : vector<1x1x128xf32> to vector<1x128xf32>
    %62 = vector.broadcast %61 : vector<1x128xf32> to vector<32x128xf32>
    %63 = arith.addf %59, %62 : vector<32x128xf32>
    %cst_47 = arith.constant 0.000000e+00 : f32
    %64 = vector.broadcast %cst_47 : f32 to vector<32x128xf32>
    %65 = arith.maximumf %63, %64 : vector<32x128xf32>
    %c0_48 = arith.constant 0 : index
    %c0_49 = arith.constant 0 : index
    %66 = vector.load %arg5[%c0_48, %c0_49] : memref<32x32xbf16, #tpu.memory_space<vmem>>, vector<32x32xbf16>
    %67 = arith.truncf %65 : vector<32x128xf32> to vector<32x128xbf16>
    %cst_50 = arith.constant dense<0.000000e+00> : vector<32x128xf32>
    %68 = tpu.matmul %66, %67, %cst_50 {dimension_numbers = #tpu.dot_dimension_numbers<[1], [0], [0], [1], [0, 0, 1, 1], [], []>} : vector<32x32xbf16>, vector<32x128xbf16>, vector<32x128xf32> -> vector<32x128xf32>
    %69 = arith.truncf %68 : vector<32x128xf32> to vector<32x128xbf16>
    %70 = vector.extract_strided_slice %69 {offsets = [0, 0], sizes = [8, 128], strides = [1, 1]} : vector<32x128xbf16> to vector<8x128xbf16>
    %c7 = arith.constant 7 : index
    %c0_51 = arith.constant 0 : index
    %c0_52 = arith.constant 0 : index
    %71 = vector.load %arg3[%c7, %c0_51, %c0_52] : memref<12x128x128xbf16, #tpu.memory_space<vmem>>, vector<1x128x128xbf16>
    %72 = vector.shape_cast %71 : vector<1x128x128xbf16> to vector<128x128xbf16>
    %cst_53 = arith.constant dense<0.000000e+00> : vector<8x128xf32>
    %73 = tpu.matmul %70, %72, %cst_53 {dimension_numbers = #tpu.dot_dimension_numbers<[1], [0], [0], [1], [0, 0, 1, 1], [], []>} : vector<8x128xbf16>, vector<128x128xbf16>, vector<8x128xf32> -> vector<8x128xf32>
    %74 = vector.extract_strided_slice %69 {offsets = [8, 0], sizes = [8, 128], strides = [1, 1]} : vector<32x128xbf16> to vector<8x128xbf16>
    %c8 = arith.constant 8 : index
    %c0_54 = arith.constant 0 : index
    %c0_55 = arith.constant 0 : index
    %75 = vector.load %arg3[%c8, %c0_54, %c0_55] : memref<12x128x128xbf16, #tpu.memory_space<vmem>>, vector<1x128x128xbf16>
    %76 = vector.shape_cast %75 : vector<1x128x128xbf16> to vector<128x128xbf16>
    %cst_56 = arith.constant dense<0.000000e+00> : vector<8x128xf32>
    %77 = tpu.matmul %74, %76, %cst_56 {dimension_numbers = #tpu.dot_dimension_numbers<[1], [0], [0], [1], [0, 0, 1, 1], [], []>} : vector<8x128xbf16>, vector<128x128xbf16>, vector<8x128xf32> -> vector<8x128xf32>
    %78 = arith.addf %73, %77 : vector<8x128xf32>
    %79 = vector.extract_strided_slice %69 {offsets = [16, 0], sizes = [8, 128], strides = [1, 1]} : vector<32x128xbf16> to vector<8x128xbf16>
    %c9 = arith.constant 9 : index
    %c0_57 = arith.constant 0 : index
    %c0_58 = arith.constant 0 : index
    %80 = vector.load %arg3[%c9, %c0_57, %c0_58] : memref<12x128x128xbf16, #tpu.memory_space<vmem>>, vector<1x128x128xbf16>
    %81 = vector.shape_cast %80 : vector<1x128x128xbf16> to vector<128x128xbf16>
    %cst_59 = arith.constant dense<0.000000e+00> : vector<8x128xf32>
    %82 = tpu.matmul %79, %81, %cst_59 {dimension_numbers = #tpu.dot_dimension_numbers<[1], [0], [0], [1], [0, 0, 1, 1], [], []>} : vector<8x128xbf16>, vector<128x128xbf16>, vector<8x128xf32> -> vector<8x128xf32>
    %83 = arith.addf %78, %82 : vector<8x128xf32>
    %84 = vector.extract_strided_slice %69 {offsets = [24, 0], sizes = [8, 128], strides = [1, 1]} : vector<32x128xbf16> to vector<8x128xbf16>
    %c10 = arith.constant 10 : index
    %c0_60 = arith.constant 0 : index
    %c0_61 = arith.constant 0 : index
    %85 = vector.load %arg3[%c10, %c0_60, %c0_61] : memref<12x128x128xbf16, #tpu.memory_space<vmem>>, vector<1x128x128xbf16>
    %86 = vector.shape_cast %85 : vector<1x128x128xbf16> to vector<128x128xbf16>
    %cst_62 = arith.constant dense<0.000000e+00> : vector<8x128xf32>
    %87 = tpu.matmul %84, %86, %cst_62 {dimension_numbers = #tpu.dot_dimension_numbers<[1], [0], [0], [1], [0, 0, 1, 1], [], []>} : vector<8x128xbf16>, vector<128x128xbf16>, vector<8x128xf32> -> vector<8x128xf32>
    %88 = arith.addf %83, %87 : vector<8x128xf32>
    %c2_63 = arith.constant 2 : index
    %c0_64 = arith.constant 0 : index
    %c0_65 = arith.constant 0 : index
    %89 = vector.load %arg6[%c2_63, %c0_64, %c0_65] : memref<4x1x128xf32, #tpu.memory_space<vmem>>, vector<1x1x128xf32>
    %90 = vector.shape_cast %89 : vector<1x1x128xf32> to vector<1x128xf32>
    %91 = vector.broadcast %90 : vector<1x128xf32> to vector<8x128xf32>
    %92 = arith.addf %88, %91 : vector<8x128xf32>
    %cst_66 = arith.constant 0.000000e+00 : f32
    %93 = vector.broadcast %cst_66 : f32 to vector<8x128xf32>
    %94 = arith.maximumf %92, %93 : vector<8x128xf32>
    %95 = arith.truncf %94 : vector<8x128xf32> to vector<8x128xbf16>
    %c11 = arith.constant 11 : index
    %c0_67 = arith.constant 0 : index
    %c0_68 = arith.constant 0 : index
    %96 = vector.load %arg3[%c11, %c0_67, %c0_68] : memref<12x128x128xbf16, #tpu.memory_space<vmem>>, vector<1x128x128xbf16>
    %97 = vector.shape_cast %96 : vector<1x128x128xbf16> to vector<128x128xbf16>
    %cst_69 = arith.constant dense<0.000000e+00> : vector<8x128xf32>
    %98 = tpu.matmul %95, %97, %cst_69 {dimension_numbers = #tpu.dot_dimension_numbers<[1], [0], [0], [1], [0, 0, 1, 1], [], []>} : vector<8x128xbf16>, vector<128x128xbf16>, vector<8x128xf32> -> vector<8x128xf32>
    %c3_70 = arith.constant 3 : index
    %c0_71 = arith.constant 0 : index
    %c0_72 = arith.constant 0 : index
    %99 = vector.load %arg6[%c3_70, %c0_71, %c0_72] : memref<4x1x128xf32, #tpu.memory_space<vmem>>, vector<1x1x128xf32>
    %100 = vector.shape_cast %99 : vector<1x1x128xf32> to vector<1x128xf32>
    %101 = vector.broadcast %100 : vector<1x128xf32> to vector<8x128xf32>
    %102 = arith.addf %98, %101 : vector<8x128xf32>
    %c0_73 = arith.constant 0 : index
    %c0_74 = arith.constant 0 : index
    %103 = vector.load %arg7[%c0_73, %c0_74] : memref<8x128xf32, #tpu.memory_space<vmem>>, vector<8x128xf32>
    tpu.vector_store %arg7[%c0_73, %c0_74], %102 {strides = array<i32>} : memref<8x128xf32, #tpu.memory_space<vmem>>, vector<8x128xf32>,
    return
  }
  func.func @transform_0(%arg0: i32) -> (i32, i32) {
    %c0_i32 = arith.constant 0 : i32
    %c0_i32_0 = arith.constant 0 : i32
    return %arg0, %c0_i32 : i32, i32
  }
  func.func @transform_1(%arg0: i32) -> (i32, i32) {
    %c0_i32 = arith.constant 0 : i32
    %c0_i32_0 = arith.constant 0 : i32
    %c0_i32_1 = arith.constant 0 : i32
    return %c0_i32, %c0_i32_0 : i32, i32
  }
  func.func @transform_2(%arg0: i32) -> (i32, i32, i32) {
    %c0_i32 = arith.constant 0 : i32
    %c0_i32_0 = arith.constant 0 : i32
    %c0_i32_1 = arith.constant 0 : i32
    %c0_i32_2 = arith.constant 0 : i32
    return %c0_i32, %c0_i32_0, %c0_i32_1 : i32, i32, i32
  }
  func.func @transform_3(%arg0: i32) -> (i32, i32) {
    %c0_i32 = arith.constant 0 : i32
    %c0_i32_0 = arith.constant 0 : i32
    %c0_i32_1 = arith.constant 0 : i32
    return %c0_i32, %c0_i32_0 : i32, i32
  }
  func.func @transform_4(%arg0: i32) -> (i32, i32) {
    %c0_i32 = arith.constant 0 : i32
    %c0_i32_0 = arith.constant 0 : i32
    %c0_i32_1 = arith.constant 0 : i32
    return %c0_i32, %c0_i32_0 : i32, i32
  }
  func.func @transform_5(%arg0: i32) -> (i32, i32, i32) {
    %c0_i32 = arith.constant 0 : i32
    %c0_i32_0 = arith.constant 0 : i32
    %c0_i32_1 = arith.constant 0 : i32
    %c0_i32_2 = arith.constant 0 : i32
    return %c0_i32, %c0_i32_0, %c0_i32_1 : i32, i32, i32
  }
  func.func @transform_6(%arg0: i32) -> (i32, i32) {
    %c0_i32 = arith.constant 0 : i32
    %c0_i32_0 = arith.constant 0 : i32
    return %arg0, %c0_i32 : i32, i32
  }
}

</mosaic_0001>

<llo_original>
// kernel: tile.18
$region0: #{tile.18}
  #allocation0 [shape = 's32[1]{0}', space=sflag, size = 0x4, scoped, tag = 'scoped memory for tile.18']
  %s0 = inlined_call_operand.vmem [shape: f32[16], index: 0, kind: input, shape index: {}]
  %s1 = inlined_call_operand.vmem [shape: f32[4,16], index: 1, kind: output, shape index: {}]
  // Predicated region
  $region2: #{tile.18} parent=0 // pred_check
    _
  $region3: #{tile.18} parent=0 // pred_check_branch
    %3 = sbr.rel (0) target = $region5
  $region4: #{tile.18} parent=0 // pred_region
    _
  $region5: #{tile.18} parent=0 // pred_fallthru
    _
  %v4 = vld [vmem:[%s0] ss:$0 sm:$0xff]
  %5 = vst [vmem:[%s1] sm:$0xf] %v4

// kernel: tile.13
$region0: #{tile.13}
  #allocation0 [shape = 's32[1]{0}', space=sflag, size = 0x4, scoped, tag = 'scoped memory for tile.13']
  %s0 = inlined_call_operand.vmem [shape: f32[8], index: 0, kind: input, shape index: {}]
  %s1 = inlined_call_operand.vmem [shape: f32[8,8], index: 1, kind: output, shape index: {}]
  // Predicated region
  $region2: #{tile.13} parent=0 // pred_check
    _
  $region3: #{tile.13} parent=0 // pred_check_branch
    %3 = sbr.rel (0) target = $region5
  $region4: #{tile.13} parent=0 // pred_region
    _
  $region5: #{tile.13} parent=0 // pred_fallthru
    _
  %v4 = vld [vmem:[%s0] ss:$0 sm:$0xff]
  %5 = vst [vmem:[%s1] sm:$0xff] %v4

// kernel: da_model_forward.1
$region0: #{da_model_forward.1}
  #allocation0 [shape = 'u32[]', space=smem, size = 0x4, offset = 0x4, fixed_abs, tag = 'smem constant byte address 0x4 - core index']
  #allocation1 [shape = 'u32[144,128]{1,0:T(1,128)}', space=vmem, size = 0x12000, scoped, tag = 'internal scratch']
  %s0 = inlined_call_operand.vmem [shape: f32[128,384], index: 0, kind: input, shape index: {}]
  %s1 = inlined_call_operand.vmem [shape: bf16[384,128], index: 1, kind: input, shape index: {}]
  %s2 = inlined_call_operand.vmem [shape: bf16[12,128,128], index: 2, kind: input, shape index: {}]
  %s3 = inlined_call_operand.vmem [shape: bf16[128,64], index: 3, kind: input, shape index: {}]
  %s4 = inlined_call_operand.vmem [shape: bf16[32,32], index: 4, kind: input, shape index: {}]
  %s5 = inlined_call_operand.vmem [shape: f32[4,1,128], index: 5, kind: input, shape index: {}]
  %s6 = inlined_call_operand.vmem [shape: f32[8,128], index: 6, kind: output, shape index: {}]
  %s7 = sld [smem:[#allocation0]]
  $region34: #{da_model_forward.1} parent=0
    _
  %s9 = ssub.s32 1, %s7
  %s10 = scalar_select 0, %s9, %s7
  // Predicated region
  $region2: #{da_model_forward.1} parent=0 // pred_check
    _
  $region3: #{da_model_forward.1} parent=0 // pred_check_branch
    %12 = sbr.rel (0) target = $region5
  $region4: #{da_model_forward.1} parent=0 // pred_region
    _
  $region5: #{da_model_forward.1} parent=0 // pred_fallthru
    _
  // Predicated region
  $region6: #{da_model_forward.1} parent=0 // pred_check
    _
  $region7: #{da_model_forward.1} parent=0 // pred_check_branch
    %14 = sbr.rel (0) target = $region9
  $region8: #{da_model_forward.1} parent=0 // pred_region
    _
  $region9: #{da_model_forward.1} parent=0 // pred_fallthru
    _
  // Predicated region
  $region10: #{da_model_forward.1} parent=0 // pred_check
    _
  $region11: #{da_model_forward.1} parent=0 // pred_check_branch
    %16 = sbr.rel (0) target = $region13
  $region12: #{da_model_forward.1} parent=0 // pred_region
    _
  $region13: #{da_model_forward.1} parent=0 // pred_fallthru
    _
  // Predicated region
  $region14: #{da_model_forward.1} parent=0 // pred_check
    _
  $region15: #{da_model_forward.1} parent=0 // pred_check_branch
    %18 = sbr.rel (0) target = $region17
  $region16: #{da_model_forward.1} parent=0 // pred_region
    _
  $region17: #{da_model_forward.1} parent=0 // pred_fallthru
    _
  // Predicated region
  $region18: #{da_model_forward.1} parent=0 // pred_check
    _
  $region19: #{da_model_forward.1} parent=0 // pred_check_branch
    %20 = sbr.rel (0) target = $region21
  $region20: #{da_model_forward.1} parent=0 // pred_region
    _
  $region21: #{da_model_forward.1} parent=0 // pred_fallthru
    _
  // Predicated region
  $region22: #{da_model_forward.1} parent=0 // pred_check
    _
  $region23: #{da_model_forward.1} parent=0 // pred_check_branch
    %22 = sbr.rel (0) target = $region25
  $region24: #{da_model_forward.1} parent=0 // pred_region
    _
  $region25: #{da_model_forward.1} parent=0 // pred_fallthru
    _
  %v24 = vld [vmem:[%s0] sm:$0xff]
  %v25 = vld [vmem:[%s0 + $0x8] sm:$0xff]
  %v26 = vld [vmem:[%s0 + $0x10] sm:$0xff]
  %v27 = vld [vmem:[%s0 + $0x18] sm:$0xff]
  %v28 = vld [vmem:[%s0 + $0x20] sm:$0xff]
  %v29 = vld [vmem:[%s0 + $0x28] sm:$0xff]
  %v30 = vld [vmem:[%s0 + $0x30] sm:$0xff]
  %v31 = vld [vmem:[%s0 + $0x38] sm:$0xff]
  %v32 = vld [vmem:[%s0 + $0x40] sm:$0xff]
  %v33 = vld [vmem:[%s0 + $0x48] sm:$0xff]
  %v34 = vld [vmem:[%s0 + $0x50] sm:$0xff]
  %v35 = vld [vmem:[%s0 + $0x58] sm:$0xff]
  %v36 = vld [vmem:[%s0 + $0x60] sm:$0xff]
  %v37 = vld [vmem:[%s0 + $0x68] sm:$0xff]
  %v38 = vld [vmem:[%s0 + $0x70] sm:$0xff]
  %v39 = vld [vmem:[%s0 + $0x78] sm:$0xff]
  %v40 = vld [vmem:[%s0 + $0x80] sm:$0xff]
  %v41 = vld [vmem:[%s0 + $0x88] sm:$0xff]
  %v42 = vld [vmem:[%s0 + $0x90] sm:$0xff]
  %v43 = vld [vmem:[%s0 + $0x98] sm:$0xff]
  %v44 = vld [vmem:[%s0 + $0xa0] sm:$0xff]
  %v45 = vld [vmem:[%s0 + $0xa8] sm:$0xff]
  %v46 = vld [vmem:[%s0 + $0xb0] sm:$0xff]
  %v47 = vld [vmem:[%s0 + $0xb8] sm:$0xff]
  %v48 = vld [vmem:[%s0 + $0xc0] sm:$0xff]
  %v49 = vld [vmem:[%s0 + $0xc8] sm:$0xff]
  %v50 = vld [vmem:[%s0 + $0xd0] sm:$0xff]
  %v51 = vld [vmem:[%s0 + $0xd8] sm:$0xff]
  %v52 = vld [vmem:[%s0 + $0xe0] sm:$0xff]
  %v53 = vld [vmem:[%s0 + $0xe8] sm:$0xff]
  %v54 = vld [vmem:[%s0 + $0xf0] sm:$0xff]
  %v55 = vld [vmem:[%s0 + $0xf8] sm:$0xff]
  %v56 = vld [vmem:[%s0 + $0x100] sm:$0xff]
  %v57 = vld [vmem:[%s0 + $0x108] sm:$0xff]
  %v58 = vld [vmem:[%s0 + $0x110] sm:$0xff]
  %v59 = vld [vmem:[%s0 + $0x118] sm:$0xff]
  %v60 = vld [vmem:[%s0 + $0x120] sm:$0xff]
  %v61 = vld [vmem:[%s0 + $0x128] sm:$0xff]
  %v62 = vld [vmem:[%s0 + $0x130] sm:$0xff]
  %v63 = vld [vmem:[%s0 + $0x138] sm:$0xff]
  %v64 = vld [vmem:[%s0 + $0x140] sm:$0xff]
  %v65 = vld [vmem:[%s0 + $0x148] sm:$0xff]
  %v66 = vld [vmem:[%s0 + $0x150] sm:$0xff]
  %v67 = vld [vmem:[%s0 + $0x158] sm:$0xff]
  %v68 = vld [vmem:[%s0 + $0x160] sm:$0xff]
  %v69 = vld [vmem:[%s0 + $0x168] sm:$0xff]
  %v70 = vld [vmem:[%s0 + $0x170] sm:$0xff]
  %v71 = vld [vmem:[%s0 + $0x178] sm:$0xff]
  %v72 = vpack.c.bf16 %v27, %v24
  %v73 = vpack.c.bf16 %v28, %v25
  %v74 = vpack.c.bf16 %v29, %v26
  %v75 = vpack.c.bf16 %v33, %v30
  %v76 = vpack.c.bf16 %v34, %v31
  %v77 = vpack.c.bf16 %v35, %v32
  %v78 = vpack.c.bf16 %v39, %v36
  %v79 = vpack.c.bf16 %v40, %v37
  %v80 = vpack.c.bf16 %v41, %v38
  %v81 = vpack.c.bf16 %v45, %v42
  %v82 = vpack.c.bf16 %v46, %v43
  %v83 = vpack.c.bf16 %v47, %v44
  %v84 = vpack.c.bf16 %v51, %v48
  %v85 = vpack.c.bf16 %v52, %v49
  %v86 = vpack.c.bf16 %v53, %v50
  %v87 = vpack.c.bf16 %v57, %v54
  %v88 = vpack.c.bf16 %v58, %v55
  %v89 = vpack.c.bf16 %v59, %v56
  %v90 = vpack.c.bf16 %v63, %v60
  %v91 = vpack.c.bf16 %v64, %v61
  %v92 = vpack.c.bf16 %v65, %v62
  %v93 = vpack.c.bf16 %v69, %v66
  %v94 = vpack.c.bf16 %v70, %v67
  %v95 = vpack.c.bf16 %v71, %v68
  %v96 = vld [vmem:[%s1] sm:$0xf]
  %v97 = vld [vmem:[%s1 + $0x4] sm:$0xf]
  %v98 = vld [vmem:[%s1 + $0x8] sm:$0xf]
  %v99 = vld [vmem:[%s1 + $0xc] sm:$0xf]
  %v100 = vld [vmem:[%s1 + $0x10] sm:$0xf]
  %v101 = vld [vmem:[%s1 + $0x14] sm:$0xf]
  %v102 = vld [vmem:[%s1 + $0x18] sm:$0xf]
  %v103 = vld [vmem:[%s1 + $0x1c] sm:$0xf]
  %v104 = vld [vmem:[%s1 + $0x20] sm:$0xf]
  %v105 = vld [vmem:[%s1 + $0x24] sm:$0xf]
  %v106 = vld [vmem:[%s1 + $0x28] sm:$0xf]
  %v107 = vld [vmem:[%s1 + $0x2c] sm:$0xf]
  %v108 = vld [vmem:[%s1 + $0x30] sm:$0xf]
  %v109 = vld [vmem:[%s1 + $0x34] sm:$0xf]
  %v110 = vld [vmem:[%s1 + $0x38] sm:$0xf]
  %v111 = vld [vmem:[%s1 + $0x3c] sm:$0xf]
  %v112 = vld [vmem:[%s1 + $0x40] sm:$0xf]
  %v113 = vld [vmem:[%s1 + $0x44] sm:$0xf]
  %v114 = vld [vmem:[%s1 + $0x48] sm:$0xf]
  %v115 = vld [vmem:[%s1 + $0x4c] sm:$0xf]
  %v116 = vld [vmem:[%s1 + $0x50] sm:$0xf]
  %v117 = vld [vmem:[%s1 + $0x54] sm:$0xf]
  %v118 = vld [vmem:[%s1 + $0x58] sm:$0xf]
  %v119 = vld [vmem:[%s1 + $0x5c] sm:$0xf]
  %v120 = vld [vmem:[%s1 + $0x60] sm:$0xf]
  %v121 = vld [vmem:[%s1 + $0x64] sm:$0xf]
  %v122 = vld [vmem:[%s1 + $0x68] sm:$0xf]
  %v123 = vld [vmem:[%s1 + $0x6c] sm:$0xf]
  %v124 = vld [vmem:[%s1 + $0x70] sm:$0xf]
  %v125 = vld [vmem:[%s1 + $0x74] sm:$0xf]
  %v126 = vld [vmem:[%s1 + $0x78] sm:$0xf]
  %v127 = vld [vmem:[%s1 + $0x7c] sm:$0xf]
  %v128 = vld [vmem:[%s1 + $0x80] sm:$0xf]
  %v129 = vld [vmem:[%s1 + $0x84] sm:$0xf]
  %v130 = vld [vmem:[%s1 + $0x88] sm:$0xf]
  %v131 = vld [vmem:[%s1 + $0x8c] sm:$0xf]
  %v132 = vld [vmem:[%s1 + $0x90] sm:$0xf]
  %v133 = vld [vmem:[%s1 + $0x94] sm:$0xf]
  %v134 = vld [vmem:[%s1 + $0x98] sm:$0xf]
  %v135 = vld [vmem:[%s1 + $0x9c] sm:$0xf]
  %v136 = vld [vmem:[%s1 + $0xa0] sm:$0xf]
  %v137 = vld [vmem:[%s1 + $0xa4] sm:$0xf]
  %v138 = vld [vmem:[%s1 + $0xa8] sm:$0xf]
  %v139 = vld [vmem:[%s1 + $0xac] sm:$0xf]
  %v140 = vld [vmem:[%s1 + $0xb0] sm:$0xf]
  %v141 = vld [vmem:[%s1 + $0xb4] sm:$0xf]
  %v142 = vld [vmem:[%s1 + $0xb8] sm:$0xf]
  %v143 = vld [vmem:[%s1 + $0xbc] sm:$0xf]
  %v192 = vunpack.c.l.b16 %v96
  %v193 = vunpack.c.l.b16 %v97
  %v194 = vunpack.c.l.b16 %v98
  %v195 = vunpack.c.l.b16 %v99
  %v196 = vunpack.c.l.b16 %v100
  %v197 = vunpack.c.l.b16 %v101
  %v198 = vunpack.c.l.b16 %v102
  %v199 = vunpack.c.l.b16 %v103
  %v200 = vunpack.c.l.b16 %v104
  %v201 = vunpack.c.l.b16 %v105
  %v202 = vunpack.c.l.b16 %v106
  %v203 = vunpack.c.l.b16 %v107
  %v204 = vunpack.c.l.b16 %v108
  %v205 = vunpack.c.l.b16 %v109
  %v206 = vunpack.c.l.b16 %v110
  %v207 = vunpack.c.l.b16 %v111
  %v208 = vunpack.c.l.b16 %v112
  %v209 = vunpack.c.l.b16 %v113
  %v210 = vunpack.c.l.b16 %v114
  %v211 = vunpack.c.l.b16 %v115
  %v212 = vunpack.c.l.b16 %v116
  %v213 = vunpack.c.l.b16 %v117
  %v214 = vunpack.c.l.b16 %v118
  %v215 = vunpack.c.l.b16 %v119
  %v216 = vunpack.c.l.b16 %v120
  %v217 = vunpack.c.l.b16 %v121
  %v218 = vunpack.c.l.b16 %v122
  %v219 = vunpack.c.l.b16 %v123
  %v220 = vunpack.c.l.b16 %v124
  %v221 = vunpack.c.l.b16 %v125
  %v222 = vunpack.c.l.b16 %v126
  %v223 = vunpack.c.l.b16 %v127
  %v224 = vunpack.c.l.b16 %v128
  %v225 = vunpack.c.l.b16 %v129
  %v226 = vunpack.c.l.b16 %v130
  %v227 = vunpack.c.l.b16 %v131
  %v228 = vunpack.c.l.b16 %v132
  %v229 = vunpack.c.l.b16 %v133
  %v230 = vunpack.c.l.b16 %v134
  %v231 = vunpack.c.l.b16 %v135
  %v232 = vunpack.c.l.b16 %v136
  %v233 = vunpack.c.l.b16 %v137
  %v234 = vunpack.c.l.b16 %v138
  %v235 = vunpack.c.l.b16 %v139
  %v236 = vunpack.c.l.b16 %v140
  %v237 = vunpack.c.l.b16 %v141
  %v238 = vunpack.c.l.b16 %v142
  %v239 = vunpack.c.l.b16 %v143
  %v240 = vpack.c.b16 %v193, %v192
  %v241 = vpack.c.b16 %v195, %v194
  %v242 = vpack.c.b16 %v197, %v196
  %v243 = vpack.c.b16 %v199, %v198
  %v244 = vpack.c.b16 %v201, %v200
  %v245 = vpack.c.b16 %v203, %v202
  %v246 = vpack.c.b16 %v205, %v204
  %v247 = vpack.c.b16 %v207, %v206
  %v248 = vpack.c.b16 %v209, %v208
  %v249 = vpack.c.b16 %v211, %v210
  %v250 = vpack.c.b16 %v213, %v212
  %v251 = vpack.c.b16 %v215, %v214
  %v252 = vpack.c.b16 %v217, %v216
  %v253 = vpack.c.b16 %v219, %v218
  %v254 = vpack.c.b16 %v221, %v220
  %v255 = vpack.c.b16 %v223, %v222
  %v256 = vpack.c.b16 %v225, %v224
  %v257 = vpack.c.b16 %v227, %v226
  %v258 = vpack.c.b16 %v229, %v228
  %v259 = vpack.c.b16 %v231, %v230
  %v260 = vpack.c.b16 %v233, %v232
  %v261 = vpack.c.b16 %v235, %v234
  %v262 = vpack.c.b16 %v237, %v236
  %v263 = vpack.c.b16 %v239, %v238
  %288 = vmatprep.subr.bf16.mxu0 0
  %289 = vmatpush1.bf16.msra.mxu0 %v240
  %290 = vmatprep.subr.bf16.mxu0 0
  %291 = vmatpush1.bf16.msra.mxu0 %v241
  %292 = vmatprep.subr.bf16.mxu0 0
  %293 = vmatpush1.bf16.msra.mxu0 %v242
  %294 = vmatprep.subr.bf16.mxu0 0
  %295 = vmatpush1.bf16.msra.mxu0 %v243
  %296 = vmatprep.subr.bf16.mxu0 0
  %297 = vmatpush1.bf16.msra.mxu0 %v244
  %298 = vmatprep.subr.bf16.mxu0 0
  %299 = vmatpush1.bf16.msra.mxu0 %v245
  %300 = vmatprep.subr.bf16.mxu0 0
  %301 = vmatpush1.bf16.msra.mxu0 %v246
  %302 = vmatprep.subr.bf16.mxu0 0
  %303 = vmatpush1.bf16.msra.mxu0 %v247
  %304 = vmatprep.subr.bf16.mxu0 0
  %305 = vmatpush1.bf16.msra.mxu0 %v248
  %306 = vmatprep.subr.bf16.mxu0 0
  %307 = vmatpush1.bf16.msra.mxu0 %v249
  %308 = vmatprep.subr.bf16.mxu0 0
  %309 = vmatpush1.bf16.msra.mxu0 %v250
  %310 = vmatprep.subr.bf16.mxu0 0
  %311 = vmatpush1.bf16.msra.mxu0 %v251
  %312 = vmatprep.subr.bf16.mxu0 0
  %313 = vmatpush1.bf16.msra.mxu0 %v252
  %314 = vmatprep.subr.bf16.mxu0 0
  %315 = vmatpush1.bf16.msra.mxu0 %v253
  %316 = vmatprep.subr.bf16.mxu0 0
  %317 = vmatpush1.bf16.msra.mxu0 %v254
  %318 = vmatprep.subr.bf16.mxu0 0
  %319 = vmatpush1.bf16.msra.mxu0 %v255
  %320 = vmatprep.mubr.bf16.mxu0 %v73
  %321 = vmatmul.mubr.bf16.gmra.mrb[0].mxu0 %v72
  %v322 = vpop.f32.mrb[0].mxu0
  %v323 = vadd.f32 0.0, %v322
  %v324 = vpop.f32.mrb[0].mxu0
  %v325 = vpop.f32.mrb[0].mxu0
  %v326 = vadd.f32 0.0, %v325
  %v327 = vpop.f32.mrb[0].mxu0
  %328 = vmatprep.mubr.bf16.mxu0 %v76
  %329 = vmatmul.mubr.bf16.gmra.mrb[0].mxu0 %v75
  %v330 = vpop.f32.mrb[0].mxu0
  %v331 = vadd.f32 0.0, %v330
  %v332 = vpop.f32.mrb[0].mxu0
  %v333 = vpop.f32.mrb[0].mxu0
  %v334 = vadd.f32 0.0, %v333
  %v335 = vpop.f32.mrb[0].mxu0
  %336 = vmatprep.mubr.bf16.mxu0 %v79
  %337 = vmatmul.mubr.bf16.gmra.mrb[0].mxu0 %v78
  %v338 = vpop.f32.mrb[0].mxu0
  %v339 = vadd.f32 0.0, %v338
  %v340 = vpop.f32.mrb[0].mxu0
  %v341 = vpop.f32.mrb[0].mxu0
  %v342 = vadd.f32 0.0, %v341
  %v343 = vpop.f32.mrb[0].mxu0
  %344 = vmatprep.mubr.bf16.mxu0 %v82
  %345 = vmatmul.mubr.bf16.gmra.mrb[0].mxu0 %v81
  %v346 = vpop.f32.mrb[0].mxu0
  %v347 = vadd.f32 0.0, %v346
  %v348 = vpop.f32.mrb[0].mxu0
  %v349 = vpop.f32.mrb[0].mxu0
  %v350 = vadd.f32 0.0, %v349
  %v351 = vpop.f32.mrb[0].mxu0
  %352 = vmatprep.mubr.bf16.mxu0 %v85
  %353 = vmatmul.mubr.bf16.gmra.mrb[0].mxu0 %v84
  %v354 = vpop.f32.mrb[0].mxu0
  %v355 = vadd.f32 0.0, %v354
  %v356 = vpop.f32.mrb[0].mxu0
  %v357 = vpop.f32.mrb[0].mxu0
  %v358 = vadd.f32 0.0, %v357
  %v359 = vpop.f32.mrb[0].mxu0
  %360 = vmatprep.mubr.bf16.mxu0 %v88
  %361 = vmatmul.mubr.bf16.gmra.mrb[0].mxu0 %v87
  %v362 = vpop.f32.mrb[0].mxu0
  %v363 = vadd.f32 0.0, %v362
  %v364 = vpop.f32.mrb[0].mxu0
  %v365 = vpop.f32.mrb[0].mxu0
  %v366 = vadd.f32 0.0, %v365
  %v367 = vpop.f32.mrb[0].mxu0
  %368 = vmatprep.mubr.bf16.mxu0 %v91
  %369 = vmatmul.mubr.bf16.gmra.mrb[0].mxu0 %v90
  %v370 = vpop.f32.mrb[0].mxu0
  %v371 = vadd.f32 0.0, %v370
  %v372 = vpop.f32.mrb[0].mxu0
  %v373 = vpop.f32.mrb[0].mxu0
  %v374 = vadd.f32 0.0, %v373
  %v375 = vpop.f32.mrb[0].mxu0
  %376 = vmatprep.mubr.bf16.mxu0 %v94
  %377 = vmatmul.mubr.bf16.gmra.mrb[0].mxu0 %v93
  %v378 = vpop.f32.mrb[0].mxu0
  %v379 = vadd.f32 0.0, %v378
  %v380 = vpop.f32.mrb[0].mxu0
  %v381 = vpop.f32.mrb[0].mxu0
  %v382 = vadd.f32 0.0, %v381
  %v383 = vpop.f32.mrb[0].mxu0
  %384 = vdwg.mxu0
  %385 = vmatprep.subr.bf16.mxu0 0
  %386 = vmatpush1.bf16.msra.mxu0 %v256
  %387 = vmatprep.subr.bf16.mxu0 0
  %388 = vmatpush1.bf16.msra.mxu0 %v257
  %389 = vmatprep.subr.bf16.mxu0 0
  %390 = vmatpush1.bf16.msra.mxu0 %v258
  %391 = vmatprep.subr.bf16.mxu0 0
  %392 = vmatpush1.bf16.msra.mxu0 %v259
  %393 = vmatprep.subr.bf16.mxu0 0
  %394 = vmatpush1.bf16.msra.mxu0 %v260
  %395 = vmatprep.subr.bf16.mxu0 0
  %396 = vmatpush1.bf16.msra.mxu0 %v261
  %397 = vmatprep.subr.bf16.mxu0 0
  %398 = vmatpush1.bf16.msra.mxu0 %v262
  %399 = vmatprep.subr.bf16.mxu0 0
  %400 = vmatpush1.bf16.msra.mxu0 %v263
  %401 = vmatprep.subr.bf16.mxu0 0
  %402 = vmatpush1.bf16.msra.mxu0 0
  %403 = vmatprep.subr.bf16.mxu0 0
  %404 = vmatpush1.bf16.msra.mxu0 0
  %405 = vmatprep.subr.bf16.mxu0 0
  %406 = vmatpush1.bf16.msra.mxu0 0
  %407 = vmatprep.subr.bf16.mxu0 0
  %408 = vmatpush1.bf16.msra.mxu0 0
  %409 = vmatprep.subr.bf16.mxu0 0
  %410 = vmatpush1.bf16.msra.mxu0 0
  %411 = vmatprep.subr.bf16.mxu0 0
  %412 = vmatpush1.bf16.msra.mxu0 0
  %413 = vmatprep.subr.bf16.mxu0 0
  %414 = vmatpush1.bf16.msra.mxu0 0
  %415 = vmatprep.subr.bf16.mxu0 0
  %416 = vmatpush1.bf16.msra.mxu0 0
  %417 = vmatprep.mubr.bf16.mxu0 0
  %418 = vmatmul.mubr.bf16.gmra.mrb[0].mxu0 %v74
  %v419 = vpop.f32.mrb[0].mxu0
  %v420 = vadd.f32 %v323, %v419
  %v421 = vpop.f32.mrb[0].mxu0
  %v422 = vpop.f32.mrb[0].mxu0
  %v423 = vadd.f32 %v326, %v422
  %v424 = vpop.f32.mrb[0].mxu0
  %425 = vmatprep.mubr.bf16.mxu0 0
  %426 = vmatmul.mubr.bf16.gmra.mrb[0].mxu0 %v77
  %v427 = vpop.f32.mrb[0].mxu0
  %v428 = vadd.f32 %v331, %v427
  %v429 = vpop.f32.mrb[0].mxu0
  %v430 = vpop.f32.mrb[0].mxu0
  %v431 = vadd.f32 %v334, %v430
  %v432 = vpop.f32.mrb[0].mxu0
  %433 = vmatprep.mubr.bf16.mxu0 0
  %434 = vmatmul.mubr.bf16.gmra.mrb[0].mxu0 %v80
  %v435 = vpop.f32.mrb[0].mxu0
  %v436 = vadd.f32 %v339, %v435
  %v437 = vpop.f32.mrb[0].mxu0
  %v438 = vpop.f32.mrb[0].mxu0
  %v439 = vadd.f32 %v342, %v438
  %v440 = vpop.f32.mrb[0].mxu0
  %441 = vmatprep.mubr.bf16.mxu0 0
  %442 = vmatmul.mubr.bf16.gmra.mrb[0].mxu0 %v83
  %v443 = vpop.f32.mrb[0].mxu0
  %v444 = vadd.f32 %v347, %v443
  %v445 = vpop.f32.mrb[0].mxu0
  %v446 = vpop.f32.mrb[0].mxu0
  %v447 = vadd.f32 %v350, %v446
  %v448 = vpop.f32.mrb[0].mxu0
  %449 = vmatprep.mubr.bf16.mxu0 0
  %450 = vmatmul.mubr.bf16.gmra.mrb[0].mxu0 %v86
  %v451 = vpop.f32.mrb[0].mxu0
  %v452 = vadd.f32 %v355, %v451
  %v453 = vpop.f32.mrb[0].mxu0
  %v454 = vpop.f32.mrb[0].mxu0
  %v455 = vadd.f32 %v358, %v454
  %v456 = vpop.f32.mrb[0].mxu0
  %457 = vmatprep.mubr.bf16.mxu0 0
  %458 = vmatmul.mubr.bf16.gmra.mrb[0].mxu0 %v89
  %v459 = vpop.f32.mrb[0].mxu0
  %v460 = vadd.f32 %v363, %v459
  %v461 = vpop.f32.mrb[0].mxu0
  %v462 = vpop.f32.mrb[0].mxu0
  %v463 = vadd.f32 %v366, %v462
  %v464 = vpop.f32.mrb[0].mxu0
  %465 = vmatprep.mubr.bf16.mxu0 0
  %466 = vmatmul.mubr.bf16.gmra.mrb[0].mxu0 %v92
  %v467 = vpop.f32.mrb[0].mxu0
  %v468 = vadd.f32 %v371, %v467
  %v469 = vpop.f32.mrb[0].mxu0
  %v470 = vpop.f32.mrb[0].mxu0
  %v471 = vadd.f32 %v374, %v470
  %v472 = vpop.f32.mrb[0].mxu0
  %473 = vmatprep.mubr.bf16.mxu0 0
  %474 = vmatmul.mubr.bf16.gmra.mrb[0].mxu0 %v95
  %v475 = vpop.f32.mrb[0].mxu0
  %v476 = vadd.f32 %v379, %v475
  %v477 = vpop.f32.mrb[0].mxu0
  %v478 = vpop.f32.mrb[0].mxu0
  %v479 = vadd.f32 %v382, %v478
  %v480 = vpop.f32.mrb[0].mxu0
  %481 = vdwg.mxu0
  %v482 = vmax.f32 %v420, %v452
  %v483 = vmax.f32 %v423, %v455
  %v484 = vmax.f32 %v428, %v460
  %v485 = vmax.f32 %v431, %v463
  %v486 = vmax.f32 %v436, %v468
  %v487 = vmax.f32 %v439, %v471
  %v488 = vmax.f32 %v444, %v476
  %v489 = vmax.f32 %v447, %v479
  %v490 = vpack.c.bf16 %v483, %v482
  %v491 = vpack.c.bf16 %v485, %v484
  %v492 = vpack.c.bf16 %v487, %v486
  %v493 = vpack.c.bf16 %v489, %v488
  %v494 = vld [vmem:[%s2] sm:$0xf]
  %v495 = vld [vmem:[%s2 + $0x4] sm:$0xf]
  %v496 = vld [vmem:[%s2 + $0x8] sm:$0xf]
  %v497 = vld [vmem:[%s2 + $0xc] sm:$0xf]
  %v498 = vld [vmem:[%s2 + $0x10] sm:$0xf]
  %v499 = vld [vmem:[%s2 + $0x14] sm:$0xf]
  %v500 = vld [vmem:[%s2 + $0x18] sm:$0xf]
  %v501 = vld [vmem:[%s2 + $0x1c] sm:$0xf]
  %v502 = vld [vmem:[%s2 + $0x20] sm:$0xf]
  %v503 = vld [vmem:[%s2 + $0x24] sm:$0xf]
  %v504 = vld [vmem:[%s2 + $0x28] sm:$0xf]
  %v505 = vld [vmem:[%s2 + $0x2c] sm:$0xf]
  %v506 = vld [vmem:[%s2 + $0x30] sm:$0xf]
  %v507 = vld [vmem:[%s2 + $0x34] sm:$0xf]
  %v508 = vld [vmem:[%s2 + $0x38] sm:$0xf]
  %v509 = vld [vmem:[%s2 + $0x3c] sm:$0xf]
  %v526 = vunpack.c.l.b16 %v494
  %v527 = vunpack.c.l.b16 %v495
  %v528 = vunpack.c.l.b16 %v496
  %v529 = vunpack.c.l.b16 %v497
  %v530 = vunpack.c.l.b16 %v498
  %v531 = vunpack.c.l.b16 %v499
  %v532 = vunpack.c.l.b16 %v500
  %v533 = vunpack.c.l.b16 %v501
  %v534 = vunpack.c.l.b16 %v502
  %v535 = vunpack.c.l.b16 %v503
  %v536 = vunpack.c.l.b16 %v504
  %v537 = vunpack.c.l.b16 %v505
  %v538 = vunpack.c.l.b16 %v506
  %v539 = vunpack.c.l.b16 %v507
  %v540 = vunpack.c.l.b16 %v508
  %v541 = vunpack.c.l.b16 %v509
  %v542 = vpack.c.b16 %v527, %v526
  %v543 = vpack.c.b16 %v529, %v528
  %v544 = vpack.c.b16 %v531, %v530
  %v545 = vpack.c.b16 %v533, %v532
  %v546 = vpack.c.b16 %v535, %v534
  %v547 = vpack.c.b16 %v537, %v536
  %v548 = vpack.c.b16 %v539, %v538
  %v549 = vpack.c.b16 %v541, %v540
  %558 = vmatprep.subr.bf16.mxu0 0
  %559 = vmatpush1.bf16.msra.mxu0 %v542
  %560 = vmatprep.subr.bf16.mxu0 0
  %561 = vmatpush1.bf16.msra.mxu0 %v543
  %562 = vmatprep.subr.bf16.mxu0 0
  %563 = vmatpush1.bf16.msra.mxu0 %v544
  %564 = vmatprep.subr.bf16.mxu0 0
  %565 = vmatpush1.bf16.msra.mxu0 %v545
  %566 = vmatprep.subr.bf16.mxu0 0
  %567 = vmatpush1.bf16.msra.mxu0 %v546
  %568 = vmatprep.subr.bf16.mxu0 0
  %569 = vmatpush1.bf16.msra.mxu0 %v547
  %570 = vmatprep.subr.bf16.mxu0 0
  %571 = vmatpush1.bf16.msra.mxu0 %v548
  %572 = vmatprep.subr.bf16.mxu0 0
  %573 = vmatpush1.bf16.msra.mxu0 %v549
  %574 = vmatprep.subr.bf16.mxu0 0
  %575 = vmatpush1.bf16.msra.mxu0 0
  %576 = vmatprep.subr.bf16.mxu0 0
  %577 = vmatpush1.bf16.msra.mxu0 0
  %578 = vmatprep.subr.bf16.mxu0 0
  %579 = vmatpush1.bf16.msra.mxu0 0
  %580 = vmatprep.subr.bf16.mxu0 0
  %581 = vmatpush1.bf16.msra.mxu0 0
  %582 = vmatprep.subr.bf16.mxu0 0
  %583 = vmatpush1.bf16.msra.mxu0 0
  %584 = vmatprep.subr.bf16.mxu0 0
  %585 = vmatpush1.bf16.msra.mxu0 0
  %586 = vmatprep.subr.bf16.mxu0 0
  %587 = vmatpush1.bf16.msra.mxu0 0
  %588 = vmatprep.subr.bf16.mxu0 0
  %589 = vmatpush1.bf16.msra.mxu0 0
  %590 = vmatprep.mubr.bf16.mxu0 0
  %591 = vmatmul.mubr.bf16.gmra.mrb[0].mxu0 %v490
  %v592 = vpop.f32.mrb[0].mxu0
  %v593 = vadd.f32 0.0, %v592
  %v594 = vpop.f32.mrb[0].mxu0
  %v595 = vpop.f32.mrb[0].mxu0
  %v596 = vadd.f32 0.0, %v595
  %v597 = vpop.f32.mrb[0].mxu0
  %598 = vmatprep.mubr.bf16.mxu0 0
  %599 = vmatmul.mubr.bf16.gmra.mrb[0].mxu0 %v491
  %v600 = vpop.f32.mrb[0].mxu0
  %v601 = vadd.f32 0.0, %v600
  %v602 = vpop.f32.mrb[0].mxu0
  %v603 = vpop.f32.mrb[0].mxu0
  %v604 = vadd.f32 0.0, %v603
  %v605 = vpop.f32.mrb[0].mxu0
  %606 = vmatprep.mubr.bf16.mxu0 0
  %607 = vmatmul.mubr.bf16.gmra.mrb[0].mxu0 %v492
  %v608 = vpop.f32.mrb[0].mxu0
  %v609 = vadd.f32 0.0, %v608
  %v610 = vpop.f32.mrb[0].mxu0
  %v611 = vpop.f32.mrb[0].mxu0
  %v612 = vadd.f32 0.0, %v611
  %v613 = vpop.f32.mrb[0].mxu0
  %614 = vmatprep.mubr.bf16.mxu0 0
  %615 = vmatmul.mubr.bf16.gmra.mrb[0].mxu0 %v493
  %v616 = vpop.f32.mrb[0].mxu0
  %v617 = vadd.f32 0.0, %v616
  %v618 = vpop.f32.mrb[0].mxu0
  %v619 = vpop.f32.mrb[0].mxu0
  %v620 = vadd.f32 0.0, %v619
  %v621 = vpop.f32.mrb[0].mxu0
  %622 = vdwg.mxu0
  %s623 = scalar_lea.vmem %s2, 64
  %v624 = vld [vmem:[%s623] sm:$0xf]
  %v625 = vld [vmem:[%s623 + $0x4] sm:$0xf]
  %v626 = vld [vmem:[%s623 + $0x8] sm:$0xf]
  %v627 = vld [vmem:[%s623 + $0xc] sm:$0xf]
  %v628 = vld [vmem:[%s623 + $0x10] sm:$0xf]
  %v629 = vld [vmem:[%s623 + $0x14] sm:$0xf]
  %v630 = vld [vmem:[%s623 + $0x18] sm:$0xf]
  %v631 = vld [vmem:[%s623 + $0x1c] sm:$0xf]
  %v632 = vld [vmem:[%s623 + $0x20] sm:$0xf]
  %v633 = vld [vmem:[%s623 + $0x24] sm:$0xf]
  %v634 = vld [vmem:[%s623 + $0x28] sm:$0xf]
  %v635 = vld [vmem:[%s623 + $0x2c] sm:$0xf]
  %v636 = vld [vmem:[%s623 + $0x30] sm:$0xf]
  %v637 = vld [vmem:[%s623 + $0x34] sm:$0xf]
  %v638 = vld [vmem:[%s623 + $0x38] sm:$0xf]
  %v639 = vld [vmem:[%s623 + $0x3c] sm:$0xf]
  %v656 = vunpack.c.l.b16 %v624
  %v657 = vunpack.c.l.b16 %v625
  %v658 = vunpack.c.l.b16 %v626
  %v659 = vunpack.c.l.b16 %v627
  %v660 = vunpack.c.l.b16 %v628
  %v661 = vunpack.c.l.b16 %v629
  %v662 = vunpack.c.l.b16 %v630
  %v663 = vunpack.c.l.b16 %v631
  %v664 = vunpack.c.l.b16 %v632
  %v665 = vunpack.c.l.b16 %v633
  %v666 = vunpack.c.l.b16 %v634
  %v667 = vunpack.c.l.b16 %v635
  %v668 = vunpack.c.l.b16 %v636
  %v669 = vunpack.c.l.b16 %v637
  %v670 = vunpack.c.l.b16 %v638
  %v671 = vunpack.c.l.b16 %v639
  %v672 = vpack.c.b16 %v657, %v656
  %v673 = vpack.c.b16 %v659, %v658
  %v674 = vpack.c.b16 %v661, %v660
  %v675 = vpack.c.b16 %v663, %v662
  %v676 = vpack.c.b16 %v665, %v664
  %v677 = vpack.c.b16 %v667, %v666
  %v678 = vpack.c.b16 %v669, %v668
  %v679 = vpack.c.b16 %v671, %v670
  %688 = vmatprep.subr.bf16.mxu0 0
  %689 = vmatpush1.bf16.msra.mxu0 %v672
  %690 = vmatprep.subr.bf16.mxu0 0
  %691 = vmatpush1.bf16.msra.mxu0 %v673
  %692 = vmatprep.subr.bf16.mxu0 0
  %693 = vmatpush1.bf16.msra.mxu0 %v674
  %694 = vmatprep.subr.bf16.mxu0 0
  %695 = vmatpush1.bf16.msra.mxu0 %v675
  %696 = vmatprep.subr.bf16.mxu0 0
  %697 = vmatpush1.bf16.msra.mxu0 %v676
  %698 = vmatprep.subr.bf16.mxu0 0
  %699 = vmatpush1.bf16.msra.mxu0 %v677
  %700 = vmatprep.subr.bf16.mxu0 0
  %701 = vmatpush1.bf16.msra.mxu0 %v678
  %702 = vmatprep.subr.bf16.mxu0 0
  %703 = vmatpush1.bf16.msra.mxu0 %v679
  %704 = vmatprep.subr.bf16.mxu0 0
  %705 = vmatpush1.bf16.msra.mxu0 0
  %706 = vmatprep.subr.bf16.mxu0 0
  %707 = vmatpush1.bf16.msra.mxu0 0
  %708 = vmatprep.subr.bf16.mxu0 0
  %709 = vmatpush1.bf16.msra.mxu0 0
  %710 = vmatprep.subr.bf16.mxu0 0
  %711 = vmatpush1.bf16.msra.mxu0 0
  %712 = vmatprep.subr.bf16.mxu0 0
  %713 = vmatpush1.bf16.msra.mxu0 0
  %714 = vmatprep.subr.bf16.mxu0 0
  %715 = vmatpush1.bf16.msra.mxu0 0
  %716 = vmatprep.subr.bf16.mxu0 0
  %717 = vmatpush1.bf16.msra.mxu0 0
  %718 = vmatprep.subr.bf16.mxu0 0
  %719 = vmatpush1.bf16.msra.mxu0 0
  %720 = vmatprep.mubr.bf16.mxu0 0
  %721 = vmatmul.mubr.bf16.gmra.mrb[0].mxu0 %v490
  %v722 = vpop.f32.mrb[0].mxu0
  %v723 = vadd.f32 0.0, %v722
  %v724 = vpop.f32.mrb[0].mxu0
  %v725 = vpop.f32.mrb[0].mxu0
  %v726 = vadd.f32 0.0, %v725
  %v727 = vpop.f32.mrb[0].mxu0
  %728 = vmatprep.mubr.bf16.mxu0 0
  %729 = vmatmul.mubr.bf16.gmra.mrb[0].mxu0 %v491
  %v730 = vpop.f32.mrb[0].mxu0
  %v731 = vadd.f32 0.0, %v730
  %v732 = vpop.f32.mrb[0].mxu0
  %v733 = vpop.f32.mrb[0].mxu0
  %v734 = vadd.f32 0.0, %v733
  %v735 = vpop.f32.mrb[0].mxu0
  %736 = vmatprep.mubr.bf16.mxu0 0
  %737 = vmatmul.mubr.bf16.gmra.mrb[0].mxu0 %v492
  %v738 = vpop.f32.mrb[0].mxu0
  %v739 = vadd.f32 0.0, %v738
  %v740 = vpop.f32.mrb[0].mxu0
  %v741 = vpop.f32.mrb[0].mxu0
  %v742 = vadd.f32 0.0, %v741
  %v743 = vpop.f32.mrb[0].mxu0
  %744 = vmatprep.mubr.bf16.mxu0 0
  %745 = vmatmul.mubr.bf16.gmra.mrb[0].mxu0 %v493
  %v746 = vpop.f32.mrb[0].mxu0
  %v747 = vadd.f32 0.0, %v746
  %v748 = vpop.f32.mrb[0].mxu0
  %v749 = vpop.f32.mrb[0].mxu0
  %v750 = vadd.f32 0.0, %v749
  %v751 = vpop.f32.mrb[0].mxu0
  %752 = vdwg.mxu0
  %v753 = vmax.f32 %v593, %v723
  %v754 = vmax.f32 %v596, %v726
  %v755 = vmax.f32 %v601, %v731
  %v756 = vmax.f32 %v604, %v734
  %v757 = vmax.f32 %v609, %v739
  %v758 = vmax.f32 %v612, %v742
  %v759 = vmax.f32 %v617, %v747
  %v760 = vmax.f32 %v620, %v750
  %v761 = vld [vmem:[%s5] sm:$0x1]
  %v763 = vlaneseq
  %v764 = vshrl.u32 %v763, 7
  %v765 = vsub.s32 0, %v764
  %v766 = vrot.slane %v761, %v765
  %v768 = vadd.f32 %v753, %v766
  %v769 = vadd.f32 %v754, %v766
  %v770 = vadd.f32 %v755, %v766
  %v771 = vadd.f32 %v756, %v766
  %v772 = vadd.f32 %v757, %v766
  %v773 = vadd.f32 %v758, %v766
  %v774 = vadd.f32 %v759, %v766
  %v775 = vadd.f32 %v760, %v766
  %v776 = vmax.f32 %v768, 0.0
  %v777 = vmax.f32 %v769, 0.0
  %v778 = vmax.f32 %v770, 0.0
  %v779 = vmax.f32 %v771, 0.0
  %v780 = vmax.f32 %v772, 0.0
  %v781 = vmax.f32 %v773, 0.0
  %v782 = vmax.f32 %v774, 0.0
  %v783 = vmax.f32 %v775, 0.0
  %v784 = vld [vmem:[%s3] sm:$0xf]
  %v785 = vld [vmem:[%s3 + $0x4] sm:$0xf]
  %v786 = vld [vmem:[%s3 + $0x8] sm:$0xf]
  %v787 = vld [vmem:[%s3 + $0xc] sm:$0xf]
  %v788 = vld [vmem:[%s3 + $0x10] sm:$0xf]
  %v789 = vld [vmem:[%s3 + $0x14] sm:$0xf]
  %v790 = vld [vmem:[%s3 + $0x18] sm:$0xf]
  %v791 = vld [vmem:[%s3 + $0x1c] sm:$0xf]
  %v792 = vld [vmem:[%s3 + $0x20] sm:$0xf]
  %v793 = vld [vmem:[%s3 + $0x24] sm:$0xf]
  %v794 = vld [vmem:[%s3 + $0x28] sm:$0xf]
  %v795 = vld [vmem:[%s3 + $0x2c] sm:$0xf]
  %v796 = vld [vmem:[%s3 + $0x30] sm:$0xf]
  %v797 = vld [vmem:[%s3 + $0x34] sm:$0xf]
  %v798 = vld [vmem:[%s3 + $0x38] sm:$0xf]
  %v799 = vld [vmem:[%s3 + $0x3c] sm:$0xf]
  %v800 = vpack.c.bf16 %v777, %v776
  %v801 = vpack.c.bf16 %v779, %v778
  %v802 = vpack.c.bf16 %v781, %v780
  %v803 = vpack.c.bf16 %v783, %v782
  %v820 = vunpack.c.l.b16 %v784
  %v821 = vunpack.c.l.b16 %v785
  %v822 = vunpack.c.l.b16 %v786
  %v823 = vunpack.c.l.b16 %v787
  %v824 = vunpack.c.l.b16 %v788
  %v825 = vunpack.c.l.b16 %v789
  %v826 = vunpack.c.l.b16 %v790
  %v827 = vunpack.c.l.b16 %v791
  %v828 = vunpack.c.l.b16 %v792
  %v829 = vunpack.c.l.b16 %v793
  %v830 = vunpack.c.l.b16 %v794
  %v831 = vunpack.c.l.b16 %v795
  %v832 = vunpack.c.l.b16 %v796
  %v833 = vunpack.c.l.b16 %v797
  %v834 = vunpack.c.l.b16 %v798
  %v835 = vunpack.c.l.b16 %v799
  %v836 = vpack.c.b16 %v821, %v820
  %v837 = vpack.c.b16 %v823, %v822
  %v838 = vpack.c.b16 %v825, %v824
  %v839 = vpack.c.b16 %v827, %v826
  %v840 = vpack.c.b16 %v829, %v828
  %v841 = vpack.c.b16 %v831, %v830
  %v842 = vpack.c.b16 %v833, %v832
  %v843 = vpack.c.b16 %v835, %v834
  %vm844 = vcmask 523264
  %v846 = vsel %vm844, %v836, 0
  %v849 = vsel %vm844, %v837, 0
  %v852 = vsel %vm844, %v838, 0
  %v855 = vsel %vm844, %v839, 0
  %v858 = vsel %vm844, %v840, 0
  %v861 = vsel %vm844, %v841, 0
  %v864 = vsel %vm844, %v842, 0
  %v867 = vsel %vm844, %v843, 0
  %869 = vmatprep.subr.bf16.mxu0 0
  %870 = vmatpush1.bf16.msra.mxu0 %v800
  %871 = vmatprep.subr.bf16.mxu0 0
  %872 = vmatpush1.bf16.msra.mxu0 %v801
  %873 = vmatprep.subr.bf16.mxu0 0
  %874 = vmatpush1.bf16.msra.mxu0 %v802
  %875 = vmatprep.subr.bf16.mxu0 0
  %876 = vmatpush1.bf16.msra.mxu0 %v803
  %877 = vmatprep.subr.bf16.mxu0 0
  %878 = vmatpush1.bf16.msra.mxu0 0
  %879 = vmatprep.subr.bf16.mxu0 0
  %880 = vmatpush1.bf16.msra.mxu0 0
  %881 = vmatprep.subr.bf16.mxu0 0
  %882 = vmatpush1.bf16.msra.mxu0 0
  %883 = vmatprep.subr.bf16.mxu0 0
  %884 = vmatpush1.bf16.msra.mxu0 0
  %885 = vmatprep.subr.bf16.mxu0 0
  %886 = vmatpush1.bf16.msra.mxu0 0
  %887 = vmatprep.subr.bf16.mxu0 0
  %888 = vmatpush1.bf16.msra.mxu0 0
  %889 = vmatprep.subr.bf16.mxu0 0
  %890 = vmatpush1.bf16.msra.mxu0 0
  %891 = vmatprep.subr.bf16.mxu0 0
  %892 = vmatpush1.bf16.msra.mxu0 0
  %893 = vmatprep.subr.bf16.mxu0 0
  %894 = vmatpush1.bf16.msra.mxu0 0
  %895 = vmatprep.subr.bf16.mxu0 0
  %896 = vmatpush1.bf16.msra.mxu0 0
  %897 = vmatprep.subr.bf16.mxu0 0
  %898 = vmatpush1.bf16.msra.mxu0 0
  %899 = vmatprep.subr.bf16.mxu0 0
  %900 = vmatpush1.bf16.msra.mxu0 0
  %901 = vmatprep.mubr.bf16.mxu0 0
  %902 = vmatmul.mubr.bf16.gmra.mrb[0].mxu0 %v846
  %v903 = vpop.f32.mrb[0].mxu0
  %v904 = vadd.f32 0.0, %v903
  %v905 = vpop.f32.mrb[0].mxu0
  %v906 = vpop.f32.mrb[0].mxu0
  %v907 = vadd.f32 0.0, %v906
  %v908 = vpop.f32.mrb[0].mxu0
  %909 = vmatprep.mubr.bf16.mxu0 0
  %910 = vmatmul.mubr.bf16.gmra.mrb[0].mxu0 %v849
  %v911 = vpop.f32.mrb[0].mxu0
  %v912 = vadd.f32 0.0, %v911
  %v913 = vpop.f32.mrb[0].mxu0
  %v914 = vpop.f32.mrb[0].mxu0
  %v915 = vadd.f32 0.0, %v914
  %v916 = vpop.f32.mrb[0].mxu0
  %917 = vmatprep.mubr.bf16.mxu0 0
  %918 = vmatmul.mubr.bf16.gmra.mrb[0].mxu0 %v852
  %v919 = vpop.f32.mrb[0].mxu0
  %v920 = vadd.f32 0.0, %v919
  %v921 = vpop.f32.mrb[0].mxu0
  %v922 = vpop.f32.mrb[0].mxu0
  %v923 = vadd.f32 0.0, %v922
  %v924 = vpop.f32.mrb[0].mxu0
  %925 = vmatprep.mubr.bf16.mxu0 0
  %926 = vmatmul.mubr.bf16.gmra.mrb[0].mxu0 %v855
  %v927 = vpop.f32.mrb[0].mxu0
  %v928 = vadd.f32 0.0, %v927
  %v929 = vpop.f32.mrb[0].mxu0
  %v930 = vpop.f32.mrb[0].mxu0
  %v931 = vadd.f32 0.0, %v930
  %v932 = vpop.f32.mrb[0].mxu0
  %933 = vmatprep.mubr.bf16.mxu0 0
  %934 = vmatmul.mubr.bf16.gmra.mrb[0].mxu0 %v858
  %v935 = vpop.f32.mrb[0].mxu0
  %v936 = vadd.f32 0.0, %v935
  %v937 = vpop.f32.mrb[0].mxu0
  %v938 = vpop.f32.mrb[0].mxu0
  %v939 = vadd.f32 0.0, %v938
  %v940 = vpop.f32.mrb[0].mxu0
  %941 = vmatprep.mubr.bf16.mxu0 0
  %942 = vmatmul.mubr.bf16.gmra.mrb[0].mxu0 %v861
  %v943 = vpop.f32.mrb[0].mxu0
  %v944 = vadd.f32 0.0, %v943
  %v945 = vpop.f32.mrb[0].mxu0
  %v946 = vpop.f32.mrb[0].mxu0
  %v947 = vadd.f32 0.0, %v946
  %v948 = vpop.f32.mrb[0].mxu0
  %949 = vmatprep.mubr.bf16.mxu0 0
  %950 = vmatmul.mubr.bf16.gmra.mrb[0].mxu0 %v864
  %v951 = vpop.f32.mrb[0].mxu0
  %v952 = vadd.f32 0.0, %v951
  %v953 = vpop.f32.mrb[0].mxu0
  %v954 = vpop.f32.mrb[0].mxu0
  %v955 = vadd.f32 0.0, %v954
  %v956 = vpop.f32.mrb[0].mxu0
  %957 = vmatprep.mubr.bf16.mxu0 0
  %958 = vmatmul.mubr.bf16.gmra.mrb[0].mxu0 %v867
  %v959 = vpop.f32.mrb[0].mxu0
  %v960 = vadd.f32 0.0, %v959
  %v961 = vpop.f32.mrb[0].mxu0
  %v962 = vpop.f32.mrb[0].mxu0
  %v963 = vadd.f32 0.0, %v962
  %v964 = vpop.f32.mrb[0].mxu0
  %965 = vdwg.mxu0
  %v966 = vpack.c.bf16 %v907, %v904
  %v967 = vpack.c.bf16 %v915, %v912
  %v968 = vpack.c.bf16 %v923, %v920
  %v969 = vpack.c.bf16 %v931, %v928
  %v970 = vpack.c.bf16 %v939, %v936
  %v971 = vpack.c.bf16 %v947, %v944
  %v972 = vpack.c.bf16 %v955, %v952
  %v973 = vpack.c.bf16 %v963, %v960
  %s974 = scalar_lea.vmem %s2, 128
  %v975 = vld [vmem:[%s974] sm:$0xf]
  %v976 = vld [vmem:[%s974 + $0x4] sm:$0xf]
  %v977 = vld [vmem:[%s974 + $0x8] sm:$0xf]
  %v978 = vld [vmem:[%s974 + $0xc] sm:$0xf]
  %v979 = vld [vmem:[%s974 + $0x10] sm:$0xf]
  %v980 = vld [vmem:[%s974 + $0x14] sm:$0xf]
  %v981 = vld [vmem:[%s974 + $0x18] sm:$0xf]
  %v982 = vld [vmem:[%s974 + $0x1c] sm:$0xf]
  %v983 = vld [vmem:[%s974 + $0x20] sm:$0xf]
  %v984 = vld [vmem:[%s974 + $0x24] sm:$0xf]
  %v985 = vld [vmem:[%s974 + $0x28] sm:$0xf]
  %v986 = vld [vmem:[%s974 + $0x2c] sm:$0xf]
  %v987 = vld [vmem:[%s974 + $0x30] sm:$0xf]
  %v988 = vld [vmem:[%s974 + $0x34] sm:$0xf]
  %v989 = vld [vmem:[%s974 + $0x38] sm:$0xf]
  %v990 = vld [vmem:[%s974 + $0x3c] sm:$0xf]
  %s991 = scalar_lea.vmem %s2, 192
  %v992 = vld [vmem:[%s991] sm:$0xf]
  %v993 = vld [vmem:[%s991 + $0x4] sm:$0xf]
  %v994 = vld [vmem:[%s991 + $0x8] sm:$0xf]
  %v995 = vld [vmem:[%s991 + $0xc] sm:$0xf]
  %v996 = vld [vmem:[%s991 + $0x10] sm:$0xf]
  %v997 = vld [vmem:[%s991 + $0x14] sm:$0xf]
  %v998 = vld [vmem:[%s991 + $0x18] sm:$0xf]
  %v999 = vld [vmem:[%s991 + $0x1c] sm:$0xf]
  %v1000 = vld [vmem:[%s991 + $0x20] sm:$0xf]
  %v1001 = vld [vmem:[%s991 + $0x24] sm:$0xf]
  %v1002 = vld [vmem:[%s991 + $0x28] sm:$0xf]
  %v1003 = vld [vmem:[%s991 + $0x2c] sm:$0xf]
  %v1004 = vld [vmem:[%s991 + $0x30] sm:$0xf]
  %v1005 = vld [vmem:[%s991 + $0x34] sm:$0xf]
  %v1006 = vld [vmem:[%s991 + $0x38] sm:$0xf]
  %v1007 = vld [vmem:[%s991 + $0x3c] sm:$0xf]
  %v1024 = vunpack.c.l.b16 %v992
  %v1025 = vunpack.c.l.b16 %v993
  %v1026 = vunpack.c.l.b16 %v994
  %v1027 = vunpack.c.l.b16 %v995
  %v1028 = vunpack.c.l.b16 %v996
  %v1029 = vunpack.c.l.b16 %v997
  %v1030 = vunpack.c.l.b16 %v998
  %v1031 = vunpack.c.l.b16 %v999
  %v1032 = vunpack.c.l.b16 %v1000
  %v1033 = vunpack.c.l.b16 %v1001
  %v1034 = vunpack.c.l.b16 %v1002
  %v1035 = vunpack.c.l.b16 %v1003
  %v1036 = vunpack.c.l.b16 %v1004
  %v1037 = vunpack.c.l.b16 %v1005
  %v1038 = vunpack.c.l.b16 %v1006
  %v1039 = vunpack.c.l.b16 %v1007
  %v1040 = vpack.c.b16 %v1025, %v1024
  %v1041 = vpack.c.b16 %v1027, %v1026
  %v1042 = vpack.c.b16 %v1029, %v1028
  %v1043 = vpack.c.b16 %v1031, %v1030
  %v1044 = vpack.c.b16 %v1033, %v1032
  %v1045 = vpack.c.b16 %v1035, %v1034
  %v1046 = vpack.c.b16 %v1037, %v1036
  %v1047 = vpack.c.b16 %v1039, %v1038
  %1056 = vmatprep.subr.bf16.mxu0 0
  %1057 = vmatpush1.bf16.msra.mxu0 %v1040
  %1058 = vmatprep.subr.bf16.mxu0 0
  %1059 = vmatpush1.bf16.msra.mxu0 %v1041
  %1060 = vmatprep.subr.bf16.mxu0 0
  %1061 = vmatpush1.bf16.msra.mxu0 %v1042
  %1062 = vmatprep.subr.bf16.mxu0 0
  %1063 = vmatpush1.bf16.msra.mxu0 %v1043
  %1064 = vmatprep.subr.bf16.mxu0 0
  %1065 = vmatpush1.bf16.msra.mxu0 %v1044
  %1066 = vmatprep.subr.bf16.mxu0 0
  %1067 = vmatpush1.bf16.msra.mxu0 %v1045
  %1068 = vmatprep.subr.bf16.mxu0 0
  %1069 = vmatpush1.bf16.msra.mxu0 %v1046
  %1070 = vmatprep.subr.bf16.mxu0 0
  %1071 = vmatpush1.bf16.msra.mxu0 %v1047
  %1072 = vmatprep.subr.bf16.mxu0 0
  %1073 = vmatpush1.bf16.msra.mxu0 0
  %1074 = vmatprep.subr.bf16.mxu0 0
  %1075 = vmatpush1.bf16.msra.mxu0 0
  %1076 = vmatprep.subr.bf16.mxu0 0
  %1077 = vmatpush1.bf16.msra.mxu0 0
  %1078 = vmatprep.subr.bf16.mxu0 0
  %1079 = vmatpush1.bf16.msra.mxu0 0
  %1080 = vmatprep.subr.bf16.mxu0 0
  %1081 = vmatpush1.bf16.msra.mxu0 0
  %1082 = vmatprep.subr.bf16.mxu0 0
  %1083 = vmatpush1.bf16.msra.mxu0 0
  %1084 = vmatprep.subr.bf16.mxu0 0
  %1085 = vmatpush1.bf16.msra.mxu0 0
  %1086 = vmatprep.subr.bf16.mxu0 0
  %1087 = vmatpush1.bf16.msra.mxu0 0
  %1088 = vmatprep.mubr.bf16.mxu0 0
  %1089 = vmatmul.mubr.bf16.gmra.mrb[0].mxu0 %v968
  %v1090 = vpop.f32.mrb[0].mxu0
  %v1091 = vadd.f32 0.0, %v1090
  %v1092 = vpop.f32.mrb[0].mxu0
  %v1093 = vpop.f32.mrb[0].mxu0
  %v1094 = vadd.f32 0.0, %v1093
  %v1095 = vpop.f32.mrb[0].mxu0
  %1096 = vmatprep.mubr.bf16.mxu0 0
  %1097 = vmatmul.mubr.bf16.gmra.mrb[0].mxu0 %v969
  %v1098 = vpop.f32.mrb[0].mxu0
  %v1099 = vadd.f32 0.0, %v1098
  %v1100 = vpop.f32.mrb[0].mxu0
  %v1101 = vpop.f32.mrb[0].mxu0
  %v1102 = vadd.f32 0.0, %v1101
  %v1103 = vpop.f32.mrb[0].mxu0
  %1104 = vdwg.mxu0
  %v1121 = vunpack.c.l.b16 %v975
  %v1122 = vunpack.c.l.b16 %v976
  %v1123 = vunpack.c.l.b16 %v977
  %v1124 = vunpack.c.l.b16 %v978
  %v1125 = vunpack.c.l.b16 %v979
  %v1126 = vunpack.c.l.b16 %v980
  %v1127 = vunpack.c.l.b16 %v981
  %v1128 = vunpack.c.l.b16 %v982
  %v1129 = vunpack.c.l.b16 %v983
  %v1130 = vunpack.c.l.b16 %v984
  %v1131 = vunpack.c.l.b16 %v985
  %v1132 = vunpack.c.l.b16 %v986
  %v1133 = vunpack.c.l.b16 %v987
  %v1134 = vunpack.c.l.b16 %v988
  %v1135 = vunpack.c.l.b16 %v989
  %v1136 = vunpack.c.l.b16 %v990
  %v1137 = vpack.c.b16 %v1122, %v1121
  %v1138 = vpack.c.b16 %v1124, %v1123
  %v1139 = vpack.c.b16 %v1126, %v1125
  %v1140 = vpack.c.b16 %v1128, %v1127
  %v1141 = vpack.c.b16 %v1130, %v1129
  %v1142 = vpack.c.b16 %v1132, %v1131
  %v1143 = vpack.c.b16 %v1134, %v1133
  %v1144 = vpack.c.b16 %v1136, %v1135
  %1153 = vmatprep.subr.bf16.mxu0 0
  %1154 = vmatpush1.bf16.msra.mxu0 %v1137
  %1155 = vmatprep.subr.bf16.mxu0 0
  %1156 = vmatpush1.bf16.msra.mxu0 %v1138
  %1157 = vmatprep.subr.bf16.mxu0 0
  %1158 = vmatpush1.bf16.msra.mxu0 %v1139
  %1159 = vmatprep.subr.bf16.mxu0 0
  %1160 = vmatpush1.bf16.msra.mxu0 %v1140
  %1161 = vmatprep.subr.bf16.mxu0 0
  %1162 = vmatpush1.bf16.msra.mxu0 %v1141
  %1163 = vmatprep.subr.bf16.mxu0 0
  %1164 = vmatpush1.bf16.msra.mxu0 %v1142
  %1165 = vmatprep.subr.bf16.mxu0 0
  %1166 = vmatpush1.bf16.msra.mxu0 %v1143
  %1167 = vmatprep.subr.bf16.mxu0 0
  %1168 = vmatpush1.bf16.msra.mxu0 %v1144
  %1169 = vmatprep.subr.bf16.mxu0 0
  %1170 = vmatpush1.bf16.msra.mxu0 0
  %1171 = vmatprep.subr.bf16.mxu0 0
  %1172 = vmatpush1.bf16.msra.mxu0 0
  %1173 = vmatprep.subr.bf16.mxu0 0
  %1174 = vmatpush1.bf16.msra.mxu0 0
  %1175 = vmatprep.subr.bf16.mxu0 0
  %1176 = vmatpush1.bf16.msra.mxu0 0
  %1177 = vmatprep.subr.bf16.mxu0 0
  %1178 = vmatpush1.bf16.msra.mxu0 0
  %1179 = vmatprep.subr.bf16.mxu0 0
  %1180 = vmatpush1.bf16.msra.mxu0 0
  %1181 = vmatprep.subr.bf16.mxu0 0
  %1182 = vmatpush1.bf16.msra.mxu0 0
  %1183 = vmatprep.subr.bf16.mxu0 0
  %1184 = vmatpush1.bf16.msra.mxu0 0
  %1185 = vmatprep.mubr.bf16.mxu0 0
  %1186 = vmatmul.mubr.bf16.gmra.mrb[0].mxu0 %v966
  %v1187 = vpop.f32.mrb[0].mxu0
  %v1188 = vadd.f32 %v1091, %v1187
  %v1189 = vpop.f32.mrb[0].mxu0
  %v1190 = vpop.f32.mrb[0].mxu0
  %v1191 = vadd.f32 %v1094, %v1190
  %v1192 = vpop.f32.mrb[0].mxu0
  %1193 = vmatprep.mubr.bf16.mxu0 0
  %1194 = vmatmul.mubr.bf16.gmra.mrb[0].mxu0 %v967
  %v1195 = vpop.f32.mrb[0].mxu0
  %v1196 = vadd.f32 %v1099, %v1195
  %v1197 = vpop.f32.mrb[0].mxu0
  %v1198 = vpop.f32.mrb[0].mxu0
  %v1199 = vadd.f32 %v1102, %v1198
  %v1200 = vpop.f32.mrb[0].mxu0
  %1201 = vdwg.mxu0
  %s1202 = scalar_lea.vmem %s2, 256
  %v1203 = vld [vmem:[%s1202] sm:$0xf]
  %v1204 = vld [vmem:[%s1202 + $0x4] sm:$0xf]
  %v1205 = vld [vmem:[%s1202 + $0x8] sm:$0xf]
  %v1206 = vld [vmem:[%s1202 + $0xc] sm:$0xf]
  %v1207 = vld [vmem:[%s1202 + $0x10] sm:$0xf]
  %v1208 = vld [vmem:[%s1202 + $0x14] sm:$0xf]
  %v1209 = vld [vmem:[%s1202 + $0x18] sm:$0xf]
  %v1210 = vld [vmem:[%s1202 + $0x1c] sm:$0xf]
  %v1211 = vld [vmem:[%s1202 + $0x20] sm:$0xf]
  %v1212 = vld [vmem:[%s1202 + $0x24] sm:$0xf]
  %v1213 = vld [vmem:[%s1202 + $0x28] sm:$0xf]
  %v1214 = vld [vmem:[%s1202 + $0x2c] sm:$0xf]
  %v1215 = vld [vmem:[%s1202 + $0x30] sm:$0xf]
  %v1216 = vld [vmem:[%s1202 + $0x34] sm:$0xf]
  %v1217 = vld [vmem:[%s1202 + $0x38] sm:$0xf]
  %v1218 = vld [vmem:[%s1202 + $0x3c] sm:$0xf]
  %v1235 = vunpack.c.l.b16 %v1203
  %v1236 = vunpack.c.l.b16 %v1204
  %v1237 = vunpack.c.l.b16 %v1205
  %v1238 = vunpack.c.l.b16 %v1206
  %v1239 = vunpack.c.l.b16 %v1207
  %v1240 = vunpack.c.l.b16 %v1208
  %v1241 = vunpack.c.l.b16 %v1209
  %v1242 = vunpack.c.l.b16 %v1210
  %v1243 = vunpack.c.l.b16 %v1211
  %v1244 = vunpack.c.l.b16 %v1212
  %v1245 = vunpack.c.l.b16 %v1213
  %v1246 = vunpack.c.l.b16 %v1214
  %v1247 = vunpack.c.l.b16 %v1215
  %v1248 = vunpack.c.l.b16 %v1216
  %v1249 = vunpack.c.l.b16 %v1217
  %v1250 = vunpack.c.l.b16 %v1218
  %v1251 = vpack.c.b16 %v1236, %v1235
  %v1252 = vpack.c.b16 %v1238, %v1237
  %v1253 = vpack.c.b16 %v1240, %v1239
  %v1254 = vpack.c.b16 %v1242, %v1241
  %v1255 = vpack.c.b16 %v1244, %v1243
  %v1256 = vpack.c.b16 %v1246, %v1245
  %v1257 = vpack.c.b16 %v1248, %v1247
  %v1258 = vpack.c.b16 %v1250, %v1249
  %1267 = vmatprep.subr.bf16.mxu0 0
  %1268 = vmatpush1.bf16.msra.mxu0 %v1251
  %1269 = vmatprep.subr.bf16.mxu0 0
  %1270 = vmatpush1.bf16.msra.mxu0 %v1252
  %1271 = vmatprep.subr.bf16.mxu0 0
  %1272 = vmatpush1.bf16.msra.mxu0 %v1253
  %1273 = vmatprep.subr.bf16.mxu0 0
  %1274 = vmatpush1.bf16.msra.mxu0 %v1254
  %1275 = vmatprep.subr.bf16.mxu0 0
  %1276 = vmatpush1.bf16.msra.mxu0 %v1255
  %1277 = vmatprep.subr.bf16.mxu0 0
  %1278 = vmatpush1.bf16.msra.mxu0 %v1256
  %1279 = vmatprep.subr.bf16.mxu0 0
  %1280 = vmatpush1.bf16.msra.mxu0 %v1257
  %1281 = vmatprep.subr.bf16.mxu0 0
  %1282 = vmatpush1.bf16.msra.mxu0 %v1258
  %1283 = vmatprep.subr.bf16.mxu0 0
  %1284 = vmatpush1.bf16.msra.mxu0 0
  %1285 = vmatprep.subr.bf16.mxu0 0
  %1286 = vmatpush1.bf16.msra.mxu0 0
  %1287 = vmatprep.subr.bf16.mxu0 0
  %1288 = vmatpush1.bf16.msra.mxu0 0
  %1289 = vmatprep.subr.bf16.mxu0 0
  %1290 = vmatpush1.bf16.msra.mxu0 0
  %1291 = vmatprep.subr.bf16.mxu0 0
  %1292 = vmatpush1.bf16.msra.mxu0 0
  %1293 = vmatprep.subr.bf16.mxu0 0
  %1294 = vmatpush1.bf16.msra.mxu0 0
  %1295 = vmatprep.subr.bf16.mxu0 0
  %1296 = vmatpush1.bf16.msra.mxu0 0
  %1297 = vmatprep.subr.bf16.mxu0 0
  %1298 = vmatpush1.bf16.msra.mxu0 0
  %1299 = vmatprep.mubr.bf16.mxu0 0
  %1300 = vmatmul.mubr.bf16.gmra.mrb[0].mxu0 %v970
  %v1301 = vpop.f32.mrb[0].mxu0
  %v1302 = vadd.f32 0.0, %v1301
  %v1303 = vpop.f32.mrb[0].mxu0
  %v1304 = vpop.f32.mrb[0].mxu0
  %v1305 = vadd.f32 0.0, %v1304
  %v1306 = vpop.f32.mrb[0].mxu0
  %1307 = vmatprep.mubr.bf16.mxu0 0
  %1308 = vmatmul.mubr.bf16.gmra.mrb[0].mxu0 %v971
  %v1309 = vpop.f32.mrb[0].mxu0
  %v1310 = vadd.f32 0.0, %v1309
  %v1311 = vpop.f32.mrb[0].mxu0
  %v1312 = vpop.f32.mrb[0].mxu0
  %v1313 = vadd.f32 0.0, %v1312
  %v1314 = vpop.f32.mrb[0].mxu0
  %1315 = vdwg.mxu0
  %v1316 = vadd.f32 %v1188, %v1302
  %v1317 = vadd.f32 %v1191, %v1305
  %v1318 = vadd.f32 %v1196, %v1310
  %v1319 = vadd.f32 %v1199, %v1313
  %1320 = vmatprep.subr.bf16.mxu0 0
  %1321 = vmatpush1.bf16.msra.mxu0 %v1040
  %1322 = vmatprep.subr.bf16.mxu0 0
  %1323 = vmatpush1.bf16.msra.mxu0 %v1041
  %1324 = vmatprep.subr.bf16.mxu0 0
  %1325 = vmatpush1.bf16.msra.mxu0 %v1042
  %1326 = vmatprep.subr.bf16.mxu0 0
  %1327 = vmatpush1.bf16.msra.mxu0 %v1043
  %1328 = vmatprep.subr.bf16.mxu0 0
  %1329 = vmatpush1.bf16.msra.mxu0 %v1044
  %1330 = vmatprep.subr.bf16.mxu0 0
  %1331 = vmatpush1.bf16.msra.mxu0 %v1045
  %1332 = vmatprep.subr.bf16.mxu0 0
  %1333 = vmatpush1.bf16.msra.mxu0 %v1046
  %1334 = vmatprep.subr.bf16.mxu0 0
  %1335 = vmatpush1.bf16.msra.mxu0 %v1047
  %1336 = vmatprep.subr.bf16.mxu0 0
  %1337 = vmatpush1.bf16.msra.mxu0 0
  %1338 = vmatprep.subr.bf16.mxu0 0
  %1339 = vmatpush1.bf16.msra.mxu0 0
  %1340 = vmatprep.subr.bf16.mxu0 0
  %1341 = vmatpush1.bf16.msra.mxu0 0
  %1342 = vmatprep.subr.bf16.mxu0 0
  %1343 = vmatpush1.bf16.msra.mxu0 0
  %1344 = vmatprep.subr.bf16.mxu0 0
  %1345 = vmatpush1.bf16.msra.mxu0 0
  %1346 = vmatprep.subr.bf16.mxu0 0
  %1347 = vmatpush1.bf16.msra.mxu0 0
  %1348 = vmatprep.subr.bf16.mxu0 0
  %1349 = vmatpush1.bf16.msra.mxu0 0
  %1350 = vmatprep.subr.bf16.mxu0 0
  %1351 = vmatpush1.bf16.msra.mxu0 0
  %1352 = vmatprep.mubr.bf16.mxu0 0
  %1353 = vmatmul.mubr.bf16.gmra.mrb[0].mxu0 %v970
  %v1354 = vpop.f32.mrb[0].mxu0
  %v1355 = vadd.f32 0.0, %v1354
  %v1356 = vpop.f32.mrb[0].mxu0
  %v1357 = vpop.f32.mrb[0].mxu0
  %v1358 = vadd.f32 0.0, %v1357
  %v1359 = vpop.f32.mrb[0].mxu0
  %1360 = vmatprep.mubr.bf16.mxu0 0
  %1361 = vmatmul.mubr.bf16.gmra.mrb[0].mxu0 %v971
  %v1362 = vpop.f32.mrb[0].mxu0
  %v1363 = vadd.f32 0.0, %v1362
  %v1364 = vpop.f32.mrb[0].mxu0
  %v1365 = vpop.f32.mrb[0].mxu0
  %v1366 = vadd.f32 0.0, %v1365
  %v1367 = vpop.f32.mrb[0].mxu0
  %1368 = vdwg.mxu0
  %1369 = vmatprep.subr.bf16.mxu0 0
  %1370 = vmatpush1.bf16.msra.mxu0 %v1137
  %1371 = vmatprep.subr.bf16.mxu0 0
  %1372 = vmatpush1.bf16.msra.mxu0 %v1138
  %1373 = vmatprep.subr.bf16.mxu0 0
  %1374 = vmatpush1.bf16.msra.mxu0 %v1139
  %1375 = vmatprep.subr.bf16.mxu0 0
  %1376 = vmatpush1.bf16.msra.mxu0 %v1140
  %1377 = vmatprep.subr.bf16.mxu0 0
  %1378 = vmatpush1.bf16.msra.mxu0 %v1141
  %1379 = vmatprep.subr.bf16.mxu0 0
  %1380 = vmatpush1.bf16.msra.mxu0 %v1142
  %1381 = vmatprep.subr.bf16.mxu0 0
  %1382 = vmatpush1.bf16.msra.mxu0 %v1143
  %1383 = vmatprep.subr.bf16.mxu0 0
  %1384 = vmatpush1.bf16.msra.mxu0 %v1144
  %1385 = vmatprep.subr.bf16.mxu0 0
  %1386 = vmatpush1.bf16.msra.mxu0 0
  %1387 = vmatprep.subr.bf16.mxu0 0
  %1388 = vmatpush1.bf16.msra.mxu0 0
  %1389 = vmatprep.subr.bf16.mxu0 0
  %1390 = vmatpush1.bf16.msra.mxu0 0
  %1391 = vmatprep.subr.bf16.mxu0 0
  %1392 = vmatpush1.bf16.msra.mxu0 0
  %1393 = vmatprep.subr.bf16.mxu0 0
  %1394 = vmatpush1.bf16.msra.mxu0 0
  %1395 = vmatprep.subr.bf16.mxu0 0
  %1396 = vmatpush1.bf16.msra.mxu0 0
  %1397 = vmatprep.subr.bf16.mxu0 0
  %1398 = vmatpush1.bf16.msra.mxu0 0
  %1399 = vmatprep.subr.bf16.mxu0 0
  %1400 = vmatpush1.bf16.msra.mxu0 0
  %1401 = vmatprep.mubr.bf16.mxu0 0
  %1402 = vmatmul.mubr.bf16.gmra.mrb[0].mxu0 %v968
  %v1403 = vpop.f32.mrb[0].mxu0
  %v1404 = vadd.f32 %v1355, %v1403
  %v1405 = vpop.f32.mrb[0].mxu0
  %v1406 = vpop.f32.mrb[0].mxu0
  %v1407 = vadd.f32 %v1358, %v1406
  %v1408 = vpop.f32.mrb[0].mxu0
  %1409 = vmatprep.mubr.bf16.mxu0 0
  %1410 = vmatmul.mubr.bf16.gmra.mrb[0].mxu0 %v969
  %v1411 = vpop.f32.mrb[0].mxu0
  %v1412 = vadd.f32 %v1363, %v1411
  %v1413 = vpop.f32.mrb[0].mxu0
  %v1414 = vpop.f32.mrb[0].mxu0
  %v1415 = vadd.f32 %v1366, %v1414
  %v1416 = vpop.f32.mrb[0].mxu0
  %1417 = vdwg.mxu0
  %1418 = vmatprep.subr.bf16.mxu0 0
  %1419 = vmatpush1.bf16.msra.mxu0 %v1251
  %1420 = vmatprep.subr.bf16.mxu0 0
  %1421 = vmatpush1.bf16.msra.mxu0 %v1252
  %1422 = vmatprep.subr.bf16.mxu0 0
  %1423 = vmatpush1.bf16.msra.mxu0 %v1253
  %1424 = vmatprep.subr.bf16.mxu0 0
  %1425 = vmatpush1.bf16.msra.mxu0 %v1254
  %1426 = vmatprep.subr.bf16.mxu0 0
  %1427 = vmatpush1.bf16.msra.mxu0 %v1255
  %1428 = vmatprep.subr.bf16.mxu0 0
  %1429 = vmatpush1.bf16.msra.mxu0 %v1256
  %1430 = vmatprep.subr.bf16.mxu0 0
  %1431 = vmatpush1.bf16.msra.mxu0 %v1257
  %1432 = vmatprep.subr.bf16.mxu0 0
  %1433 = vmatpush1.bf16.msra.mxu0 %v1258
  %1434 = vmatprep.subr.bf16.mxu0 0
  %1435 = vmatpush1.bf16.msra.mxu0 0
  %1436 = vmatprep.subr.bf16.mxu0 0
  %1437 = vmatpush1.bf16.msra.mxu0 0
  %1438 = vmatprep.subr.bf16.mxu0 0
  %1439 = vmatpush1.bf16.msra.mxu0 0
  %1440 = vmatprep.subr.bf16.mxu0 0
  %1441 = vmatpush1.bf16.msra.mxu0 0
  %1442 = vmatprep.subr.bf16.mxu0 0
  %1443 = vmatpush1.bf16.msra.mxu0 0
  %1444 = vmatprep.subr.bf16.mxu0 0
  %1445 = vmatpush1.bf16.msra.mxu0 0
  %1446 = vmatprep.subr.bf16.mxu0 0
  %1447 = vmatpush1.bf16.msra.mxu0 0
  %1448 = vmatprep.subr.bf16.mxu0 0
  %1449 = vmatpush1.bf16.msra.mxu0 0
  %1450 = vmatprep.mubr.bf16.mxu0 0
  %1451 = vmatmul.mubr.bf16.gmra.mrb[0].mxu0 %v972
  %v1452 = vpop.f32.mrb[0].mxu0
  %v1453 = vadd.f32 0.0, %v1452
  %v1454 = vpop.f32.mrb[0].mxu0
  %v1455 = vpop.f32.mrb[0].mxu0
  %v1456 = vadd.f32 0.0, %v1455
  %v1457 = vpop.f32.mrb[0].mxu0
  %1458 = vmatprep.mubr.bf16.mxu0 0
  %1459 = vmatmul.mubr.bf16.gmra.mrb[0].mxu0 %v973
  %v1460 = vpop.f32.mrb[0].mxu0
  %v1461 = vadd.f32 0.0, %v1460
  %v1462 = vpop.f32.mrb[0].mxu0
  %v1463 = vpop.f32.mrb[0].mxu0
  %v1464 = vadd.f32 0.0, %v1463
  %v1465 = vpop.f32.mrb[0].mxu0
  %1466 = vdwg.mxu0
  %v1467 = vadd.f32 %v1404, %v1453
  %v1468 = vadd.f32 %v1407, %v1456
  %v1469 = vadd.f32 %v1412, %v1461
  %v1470 = vadd.f32 %v1415, %v1464
  %v1471 = vmax.f32 %v1316, %v1467
  %v1472 = vmax.f32 %v1317, %v1468
  %v1473 = vmax.f32 %v1318, %v1469
  %v1474 = vmax.f32 %v1319, %v1470
  %v1475 = vpack.c.bf16 %v1472, %v1471
  %v1476 = vpack.c.bf16 %v1474, %v1473
  %s1477 = scalar_lea.vmem %s2, 320
  %v1478 = vld [vmem:[%s1477] sm:$0xf]
  %v1479 = vld [vmem:[%s1477 + $0x4] sm:$0xf]
  %v1480 = vld [vmem:[%s1477 + $0x8] sm:$0xf]
  %v1481 = vld [vmem:[%s1477 + $0xc] sm:$0xf]
  %v1482 = vld [vmem:[%s1477 + $0x10] sm:$0xf]
  %v1483 = vld [vmem:[%s1477 + $0x14] sm:$0xf]
  %v1484 = vld [vmem:[%s1477 + $0x18] sm:$0xf]
  %v1485 = vld [vmem:[%s1477 + $0x1c] sm:$0xf]
  %v1486 = vld [vmem:[%s1477 + $0x20] sm:$0xf]
  %v1487 = vld [vmem:[%s1477 + $0x24] sm:$0xf]
  %v1488 = vld [vmem:[%s1477 + $0x28] sm:$0xf]
  %v1489 = vld [vmem:[%s1477 + $0x2c] sm:$0xf]
  %v1490 = vld [vmem:[%s1477 + $0x30] sm:$0xf]
  %v1491 = vld [vmem:[%s1477 + $0x34] sm:$0xf]
  %v1492 = vld [vmem:[%s1477 + $0x38] sm:$0xf]
  %v1493 = vld [vmem:[%s1477 + $0x3c] sm:$0xf]
  %v1510 = vunpack.c.l.b16 %v1478
  %v1511 = vunpack.c.l.b16 %v1479
  %v1512 = vunpack.c.l.b16 %v1480
  %v1513 = vunpack.c.l.b16 %v1481
  %v1514 = vunpack.c.l.b16 %v1482
  %v1515 = vunpack.c.l.b16 %v1483
  %v1516 = vunpack.c.l.b16 %v1484
  %v1517 = vunpack.c.l.b16 %v1485
  %v1518 = vunpack.c.l.b16 %v1486
  %v1519 = vunpack.c.l.b16 %v1487
  %v1520 = vunpack.c.l.b16 %v1488
  %v1521 = vunpack.c.l.b16 %v1489
  %v1522 = vunpack.c.l.b16 %v1490
  %v1523 = vunpack.c.l.b16 %v1491
  %v1524 = vunpack.c.l.b16 %v1492
  %v1525 = vunpack.c.l.b16 %v1493
  %v1526 = vpack.c.b16 %v1511, %v1510
  %v1527 = vpack.c.b16 %v1513, %v1512
  %v1528 = vpack.c.b16 %v1515, %v1514
  %v1529 = vpack.c.b16 %v1517, %v1516
  %v1530 = vpack.c.b16 %v1519, %v1518
  %v1531 = vpack.c.b16 %v1521, %v1520
  %v1532 = vpack.c.b16 %v1523, %v1522
  %v1533 = vpack.c.b16 %v1525, %v1524
  %1542 = vmatprep.subr.bf16.mxu0 0
  %1543 = vmatpush1.bf16.msra.mxu0 %v1526
  %1544 = vmatprep.subr.bf16.mxu0 0
  %1545 = vmatpush1.bf16.msra.mxu0 %v1527
  %1546 = vmatprep.subr.bf16.mxu0 0
  %1547 = vmatpush1.bf16.msra.mxu0 %v1528
  %1548 = vmatprep.subr.bf16.mxu0 0
  %1549 = vmatpush1.bf16.msra.mxu0 %v1529
  %1550 = vmatprep.subr.bf16.mxu0 0
  %1551 = vmatpush1.bf16.msra.mxu0 %v1530
  %1552 = vmatprep.subr.bf16.mxu0 0
  %1553 = vmatpush1.bf16.msra.mxu0 %v1531
  %1554 = vmatprep.subr.bf16.mxu0 0
  %1555 = vmatpush1.bf16.msra.mxu0 %v1532
  %1556 = vmatprep.subr.bf16.mxu0 0
  %1557 = vmatpush1.bf16.msra.mxu0 %v1533
  %1558 = vmatprep.subr.bf16.mxu0 0
  %1559 = vmatpush1.bf16.msra.mxu0 0
  %1560 = vmatprep.subr.bf16.mxu0 0
  %1561 = vmatpush1.bf16.msra.mxu0 0
  %1562 = vmatprep.subr.bf16.mxu0 0
  %1563 = vmatpush1.bf16.msra.mxu0 0
  %1564 = vmatprep.subr.bf16.mxu0 0
  %1565 = vmatpush1.bf16.msra.mxu0 0
  %1566 = vmatprep.subr.bf16.mxu0 0
  %1567 = vmatpush1.bf16.msra.mxu0 0
  %1568 = vmatprep.subr.bf16.mxu0 0
  %1569 = vmatpush1.bf16.msra.mxu0 0
  %1570 = vmatprep.subr.bf16.mxu0 0
  %1571 = vmatpush1.bf16.msra.mxu0 0
  %1572 = vmatprep.subr.bf16.mxu0 0
  %1573 = vmatpush1.bf16.msra.mxu0 0
  %1574 = vmatprep.mubr.bf16.mxu0 0
  %1575 = vmatmul.mubr.bf16.gmra.mrb[0].mxu0 %v1475
  %v1576 = vpop.f32.mrb[0].mxu0
  %v1577 = vadd.f32 0.0, %v1576
  %v1578 = vpop.f32.mrb[0].mxu0
  %v1579 = vpop.f32.mrb[0].mxu0
  %v1580 = vadd.f32 0.0, %v1579
  %v1581 = vpop.f32.mrb[0].mxu0
  %1582 = vmatprep.mubr.bf16.mxu0 0
  %1583 = vmatmul.mubr.bf16.gmra.mrb[0].mxu0 %v1476
  %v1584 = vpop.f32.mrb[0].mxu0
  %v1585 = vadd.f32 0.0, %v1584
  %v1586 = vpop.f32.mrb[0].mxu0
  %v1587 = vpop.f32.mrb[0].mxu0
  %v1588 = vadd.f32 0.0, %v1587
  %v1589 = vpop.f32.mrb[0].mxu0
  %1590 = vdwg.mxu0
  %s1591 = scalar_lea.vmem %s2, 384
  %v1592 = vld [vmem:[%s1591] sm:$0xf]
  %v1593 = vld [vmem:[%s1591 + $0x4] sm:$0xf]
  %v1594 = vld [vmem:[%s1591 + $0x8] sm:$0xf]
  %v1595 = vld [vmem:[%s1591 + $0xc] sm:$0xf]
  %v1596 = vld [vmem:[%s1591 + $0x10] sm:$0xf]
  %v1597 = vld [vmem:[%s1591 + $0x14] sm:$0xf]
  %v1598 = vld [vmem:[%s1591 + $0x18] sm:$0xf]
  %v1599 = vld [vmem:[%s1591 + $0x1c] sm:$0xf]
  %v1600 = vld [vmem:[%s1591 + $0x20] sm:$0xf]
  %v1601 = vld [vmem:[%s1591 + $0x24] sm:$0xf]
  %v1602 = vld [vmem:[%s1591 + $0x28] sm:$0xf]
  %v1603 = vld [vmem:[%s1591 + $0x2c] sm:$0xf]
  %v1604 = vld [vmem:[%s1591 + $0x30] sm:$0xf]
  %v1605 = vld [vmem:[%s1591 + $0x34] sm:$0xf]
  %v1606 = vld [vmem:[%s1591 + $0x38] sm:$0xf]
  %v1607 = vld [vmem:[%s1591 + $0x3c] sm:$0xf]
  %v1624 = vunpack.c.l.b16 %v1592
  %v1625 = vunpack.c.l.b16 %v1593
  %v1626 = vunpack.c.l.b16 %v1594
  %v1627 = vunpack.c.l.b16 %v1595
  %v1628 = vunpack.c.l.b16 %v1596
  %v1629 = vunpack.c.l.b16 %v1597
  %v1630 = vunpack.c.l.b16 %v1598
  %v1631 = vunpack.c.l.b16 %v1599
  %v1632 = vunpack.c.l.b16 %v1600
  %v1633 = vunpack.c.l.b16 %v1601
  %v1634 = vunpack.c.l.b16 %v1602
  %v1635 = vunpack.c.l.b16 %v1603
  %v1636 = vunpack.c.l.b16 %v1604
  %v1637 = vunpack.c.l.b16 %v1605
  %v1638 = vunpack.c.l.b16 %v1606
  %v1639 = vunpack.c.l.b16 %v1607
  %v1640 = vpack.c.b16 %v1625, %v1624
  %v1641 = vpack.c.b16 %v1627, %v1626
  %v1642 = vpack.c.b16 %v1629, %v1628
  %v1643 = vpack.c.b16 %v1631, %v1630
  %v1644 = vpack.c.b16 %v1633, %v1632
  %v1645 = vpack.c.b16 %v1635, %v1634
  %v1646 = vpack.c.b16 %v1637, %v1636
  %v1647 = vpack.c.b16 %v1639, %v1638
  %1656 = vmatprep.subr.bf16.mxu0 0
  %1657 = vmatpush1.bf16.msra.mxu0 %v1640
  %1658 = vmatprep.subr.bf16.mxu0 0
  %1659 = vmatpush1.bf16.msra.mxu0 %v1641
  %1660 = vmatprep.subr.bf16.mxu0 0
  %1661 = vmatpush1.bf16.msra.mxu0 %v1642
  %1662 = vmatprep.subr.bf16.mxu0 0
  %1663 = vmatpush1.bf16.msra.mxu0 %v1643
  %1664 = vmatprep.subr.bf16.mxu0 0
  %1665 = vmatpush1.bf16.msra.mxu0 %v1644
  %1666 = vmatprep.subr.bf16.mxu0 0
  %1667 = vmatpush1.bf16.msra.mxu0 %v1645
  %1668 = vmatprep.subr.bf16.mxu0 0
  %1669 = vmatpush1.bf16.msra.mxu0 %v1646
  %1670 = vmatprep.subr.bf16.mxu0 0
  %1671 = vmatpush1.bf16.msra.mxu0 %v1647
  %1672 = vmatprep.subr.bf16.mxu0 0
  %1673 = vmatpush1.bf16.msra.mxu0 0
  %1674 = vmatprep.subr.bf16.mxu0 0
  %1675 = vmatpush1.bf16.msra.mxu0 0
  %1676 = vmatprep.subr.bf16.mxu0 0
  %1677 = vmatpush1.bf16.msra.mxu0 0
  %1678 = vmatprep.subr.bf16.mxu0 0
  %1679 = vmatpush1.bf16.msra.mxu0 0
  %1680 = vmatprep.subr.bf16.mxu0 0
  %1681 = vmatpush1.bf16.msra.mxu0 0
  %1682 = vmatprep.subr.bf16.mxu0 0
  %1683 = vmatpush1.bf16.msra.mxu0 0
  %1684 = vmatprep.subr.bf16.mxu0 0
  %1685 = vmatpush1.bf16.msra.mxu0 0
  %1686 = vmatprep.subr.bf16.mxu0 0
  %1687 = vmatpush1.bf16.msra.mxu0 0
  %1688 = vmatprep.mubr.bf16.mxu0 0
  %1689 = vmatmul.mubr.bf16.gmra.mrb[0].mxu0 %v1475
  %v1690 = vpop.f32.mrb[0].mxu0
  %v1691 = vadd.f32 0.0, %v1690
  %v1692 = vpop.f32.mrb[0].mxu0
  %v1693 = vpop.f32.mrb[0].mxu0
  %v1694 = vadd.f32 0.0, %v1693
  %v1695 = vpop.f32.mrb[0].mxu0
  %1696 = vmatprep.mubr.bf16.mxu0 0
  %1697 = vmatmul.mubr.bf16.gmra.mrb[0].mxu0 %v1476
  %v1698 = vpop.f32.mrb[0].mxu0
  %v1699 = vadd.f32 0.0, %v1698
  %v1700 = vpop.f32.mrb[0].mxu0
  %v1701 = vpop.f32.mrb[0].mxu0
  %v1702 = vadd.f32 0.0, %v1701
  %v1703 = vpop.f32.mrb[0].mxu0
  %1704 = vdwg.mxu0
  %v1705 = vmax.f32 %v1577, %v1691
  %v1706 = vmax.f32 %v1580, %v1694
  %v1707 = vmax.f32 %v1585, %v1699
  %v1708 = vmax.f32 %v1588, %v1702
  %s1709 = scalar_lea.vmem %s5, 1
  %v1710 = vld [vmem:[%s1709] sm:$0x1]
  %v1712 = vlaneseq
  %v1713 = vshrl.u32 %v1712, 7
  %v1714 = vsub.s32 0, %v1713
  %v1715 = vrot.slane %v1710, %v1714
  %v1717 = vadd.f32 %v1705, %v1715
  %v1718 = vadd.f32 %v1706, %v1715
  %v1719 = vadd.f32 %v1707, %v1715
  %v1720 = vadd.f32 %v1708, %v1715
  %v1721 = vmax.f32 %v1717, 0.0
  %v1722 = vmax.f32 %v1718, 0.0
  %v1723 = vmax.f32 %v1719, 0.0
  %v1724 = vmax.f32 %v1720, 0.0
  %v1725 = vld [vmem:[%s4] sm:$0xf]
  %v1726 = vld [vmem:[%s4 + $0x4] sm:$0xf]
  %v1727 = vld [vmem:[%s4 + $0x8] sm:$0xf]
  %v1728 = vld [vmem:[%s4 + $0xc] sm:$0xf]
  %v1729 = vpack.c.bf16 %v1722, %v1721
  %v1730 = vpack.c.bf16 %v1724, %v1723
  %v1735 = vunpack.c.l.b16 %v1725
  %v1736 = vunpack.c.l.b16 %v1726
  %v1737 = vunpack.c.l.b16 %v1727
  %v1738 = vunpack.c.l.b16 %v1728
  %v1739 = vpack.c.b16 %v1736, %v1735
  %v1740 = vpack.c.b16 %v1738, %v1737
  %vm1741 = vcmask 261120
  %v1743 = vsel %vm1741, %v1739, 0
  %v1746 = vsel %vm1741, %v1740, 0
  %1748 = vmatprep.subr.bf16.mxu0 0
  %1749 = vmatpush1.bf16.msra.mxu0 %v1729
  %1750 = vmatprep.subr.bf16.mxu0 0
  %1751 = vmatpush1.bf16.msra.mxu0 %v1730
  %1752 = vmatprep.subr.bf16.mxu0 0
  %1753 = vmatpush1.bf16.msra.mxu0 0
  %1754 = vmatprep.subr.bf16.mxu0 0
  %1755 = vmatpush1.bf16.msra.mxu0 0
  %1756 = vmatprep.subr.bf16.mxu0 0
  %1757 = vmatpush1.bf16.msra.mxu0 0
  %1758 = vmatprep.subr.bf16.mxu0 0
  %1759 = vmatpush1.bf16.msra.mxu0 0
  %1760 = vmatprep.subr.bf16.mxu0 0
  %1761 = vmatpush1.bf16.msra.mxu0 0
  %1762 = vmatprep.subr.bf16.mxu0 0
  %1763 = vmatpush1.bf16.msra.mxu0 0
  %1764 = vmatprep.subr.bf16.mxu0 0
  %1765 = vmatpush1.bf16.msra.mxu0 0
  %1766 = vmatprep.subr.bf16.mxu0 0
  %1767 = vmatpush1.bf16.msra.mxu0 0
  %1768 = vmatprep.subr.bf16.mxu0 0
  %1769 = vmatpush1.bf16.msra.mxu0 0
  %1770 = vmatprep.subr.bf16.mxu0 0
  %1771 = vmatpush1.bf16.msra.mxu0 0
  %1772 = vmatprep.subr.bf16.mxu0 0
  %1773 = vmatpush1.bf16.msra.mxu0 0
  %1774 = vmatprep.subr.bf16.mxu0 0
  %1775 = vmatpush1.bf16.msra.mxu0 0
  %1776 = vmatprep.subr.bf16.mxu0 0
  %1777 = vmatpush1.bf16.msra.mxu0 0
  %1778 = vmatprep.subr.bf16.mxu0 0
  %1779 = vmatpush1.bf16.msra.mxu0 0
  %1780 = vmatprep.mubr.bf16.mxu0 0
  %1781 = vmatmul.mubr.bf16.gmra.mrb[0].mxu0 %v1743
  %v1782 = vpop.f32.mrb[0].mxu0
  %v1783 = vadd.f32 0.0, %v1782
  %v1784 = vpop.f32.mrb[0].mxu0
  %v1785 = vpop.f32.mrb[0].mxu0
  %v1786 = vadd.f32 0.0, %v1785
  %v1787 = vpop.f32.mrb[0].mxu0
  %1788 = vmatprep.mubr.bf16.mxu0 0
  %1789 = vmatmul.mubr.bf16.gmra.mrb[0].mxu0 %v1746
  %v1790 = vpop.f32.mrb[0].mxu0
  %v1791 = vadd.f32 0.0, %v1790
  %v1792 = vpop.f32.mrb[0].mxu0
  %v1793 = vpop.f32.mrb[0].mxu0
  %v1794 = vadd.f32 0.0, %v1793
  %v1795 = vpop.f32.mrb[0].mxu0
  %1796 = vdwg.mxu0
  %v1797 = vpack.c.bf16 %v1786, %v1783
  %v1798 = vpack.c.bf16 %v1794, %v1791
  %s1799 = scalar_lea.vmem %s2, 448
  %v1800 = vld [vmem:[%s1799] sm:$0xf]
  %v1801 = vld [vmem:[%s1799 + $0x4] sm:$0xf]
  %v1802 = vld [vmem:[%s1799 + $0x8] sm:$0xf]
  %v1803 = vld [vmem:[%s1799 + $0xc] sm:$0xf]
  %v1804 = vld [vmem:[%s1799 + $0x10] sm:$0xf]
  %v1805 = vld [vmem:[%s1799 + $0x14] sm:$0xf]
  %v1806 = vld [vmem:[%s1799 + $0x18] sm:$0xf]
  %v1807 = vld [vmem:[%s1799 + $0x1c] sm:$0xf]
  %v1808 = vld [vmem:[%s1799 + $0x20] sm:$0xf]
  %v1809 = vld [vmem:[%s1799 + $0x24] sm:$0xf]
  %v1810 = vld [vmem:[%s1799 + $0x28] sm:$0xf]
  %v1811 = vld [vmem:[%s1799 + $0x2c] sm:$0xf]
  %v1812 = vld [vmem:[%s1799 + $0x30] sm:$0xf]
  %v1813 = vld [vmem:[%s1799 + $0x34] sm:$0xf]
  %v1814 = vld [vmem:[%s1799 + $0x38] sm:$0xf]
  %v1815 = vld [vmem:[%s1799 + $0x3c] sm:$0xf]
  %s1816 = scalar_lea.vmem %s2, 512
  %v1817 = vld [vmem:[%s1816] sm:$0xf]
  %v1818 = vld [vmem:[%s1816 + $0x4] sm:$0xf]
  %v1819 = vld [vmem:[%s1816 + $0x8] sm:$0xf]
  %v1820 = vld [vmem:[%s1816 + $0xc] sm:$0xf]
  %v1821 = vld [vmem:[%s1816 + $0x10] sm:$0xf]
  %v1822 = vld [vmem:[%s1816 + $0x14] sm:$0xf]
  %v1823 = vld [vmem:[%s1816 + $0x18] sm:$0xf]
  %v1824 = vld [vmem:[%s1816 + $0x1c] sm:$0xf]
  %v1825 = vld [vmem:[%s1816 + $0x20] sm:$0xf]
  %v1826 = vld [vmem:[%s1816 + $0x24] sm:$0xf]
  %v1827 = vld [vmem:[%s1816 + $0x28] sm:$0xf]
  %v1828 = vld [vmem:[%s1816 + $0x2c] sm:$0xf]
  %v1829 = vld [vmem:[%s1816 + $0x30] sm:$0xf]
  %v1830 = vld [vmem:[%s1816 + $0x34] sm:$0xf]
  %v1831 = vld [vmem:[%s1816 + $0x38] sm:$0xf]
  %v1832 = vld [vmem:[%s1816 + $0x3c] sm:$0xf]
  %v1834 = vrot.slane %v1797, 4
  %v1852 = vunpack.c.l.b16 %v1817
  %v1853 = vunpack.c.l.b16 %v1818
  %v1854 = vunpack.c.l.b16 %v1819
  %v1855 = vunpack.c.l.b16 %v1820
  %v1856 = vunpack.c.l.b16 %v1821
  %v1857 = vunpack.c.l.b16 %v1822
  %v1858 = vunpack.c.l.b16 %v1823
  %v1859 = vunpack.c.l.b16 %v1824
  %v1860 = vunpack.c.l.b16 %v1825
  %v1861 = vunpack.c.l.b16 %v1826
  %v1862 = vunpack.c.l.b16 %v1827
  %v1863 = vunpack.c.l.b16 %v1828
  %v1864 = vunpack.c.l.b16 %v1829
  %v1865 = vunpack.c.l.b16 %v1830
  %v1866 = vunpack.c.l.b16 %v1831
  %v1867 = vunpack.c.l.b16 %v1832
  %v1868 = vpack.c.b16 %v1853, %v1852
  %v1869 = vpack.c.b16 %v1855, %v1854
  %v1870 = vpack.c.b16 %v1857, %v1856
  %v1871 = vpack.c.b16 %v1859, %v1858
  %v1872 = vpack.c.b16 %v1861, %v1860
  %v1873 = vpack.c.b16 %v1863, %v1862
  %v1874 = vpack.c.b16 %v1865, %v1864
  %v1875 = vpack.c.b16 %v1867, %v1866
  %1884 = vmatprep.subr.bf16.mxu0 0
  %1885 = vmatpush1.bf16.msra.mxu0 %v1868
  %1886 = vmatprep.subr.bf16.mxu0 0
  %1887 = vmatpush1.bf16.msra.mxu0 %v1869
  %1888 = vmatprep.subr.bf16.mxu0 0
  %1889 = vmatpush1.bf16.msra.mxu0 %v1870
  %1890 = vmatprep.subr.bf16.mxu0 0
  %1891 = vmatpush1.bf16.msra.mxu0 %v1871
  %1892 = vmatprep.subr.bf16.mxu0 0
  %1893 = vmatpush1.bf16.msra.mxu0 %v1872
  %1894 = vmatprep.subr.bf16.mxu0 0
  %1895 = vmatpush1.bf16.msra.mxu0 %v1873
  %1896 = vmatprep.subr.bf16.mxu0 0
  %1897 = vmatpush1.bf16.msra.mxu0 %v1874
  %1898 = vmatprep.subr.bf16.mxu0 0
  %1899 = vmatpush1.bf16.msra.mxu0 %v1875
  %1900 = vmatprep.subr.bf16.mxu0 0
  %1901 = vmatpush1.bf16.msra.mxu0 0
  %1902 = vmatprep.subr.bf16.mxu0 0
  %1903 = vmatpush1.bf16.msra.mxu0 0
  %1904 = vmatprep.subr.bf16.mxu0 0
  %1905 = vmatpush1.bf16.msra.mxu0 0
  %1906 = vmatprep.subr.bf16.mxu0 0
  %1907 = vmatpush1.bf16.msra.mxu0 0
  %1908 = vmatprep.subr.bf16.mxu0 0
  %1909 = vmatpush1.bf16.msra.mxu0 0
  %1910 = vmatprep.subr.bf16.mxu0 0
  %1911 = vmatpush1.bf16.msra.mxu0 0
  %1912 = vmatprep.subr.bf16.mxu0 0
  %1913 = vmatpush1.bf16.msra.mxu0 0
  %1914 = vmatprep.subr.bf16.mxu0 0
  %1915 = vmatpush1.bf16.msra.mxu0 0
  %1916 = vmatprep.mubr.bf16.mxu0 0
  %1917 = vmatmul.mubr.bf16.gmra.mrb[0].mxu0 %v1834
  %v1918 = vpop.f32.mrb[0].mxu0
  %v1919 = vadd.f32 0.0, %v1918
  %v1920 = vpop.f32.mrb[0].mxu0
  %v1921 = vpop.f32.mrb[0].mxu0
  %v1922 = vpop.f32.mrb[0].mxu0
  %1923 = vdwg.mxu0
  %v1940 = vunpack.c.l.b16 %v1800
  %v1941 = vunpack.c.l.b16 %v1801
  %v1942 = vunpack.c.l.b16 %v1802
  %v1943 = vunpack.c.l.b16 %v1803
  %v1944 = vunpack.c.l.b16 %v1804
  %v1945 = vunpack.c.l.b16 %v1805
  %v1946 = vunpack.c.l.b16 %v1806
  %v1947 = vunpack.c.l.b16 %v1807
  %v1948 = vunpack.c.l.b16 %v1808
  %v1949 = vunpack.c.l.b16 %v1809
  %v1950 = vunpack.c.l.b16 %v1810
  %v1951 = vunpack.c.l.b16 %v1811
  %v1952 = vunpack.c.l.b16 %v1812
  %v1953 = vunpack.c.l.b16 %v1813
  %v1954 = vunpack.c.l.b16 %v1814
  %v1955 = vunpack.c.l.b16 %v1815
  %v1956 = vpack.c.b16 %v1941, %v1940
  %v1957 = vpack.c.b16 %v1943, %v1942
  %v1958 = vpack.c.b16 %v1945, %v1944
  %v1959 = vpack.c.b16 %v1947, %v1946
  %v1960 = vpack.c.b16 %v1949, %v1948
  %v1961 = vpack.c.b16 %v1951, %v1950
  %v1962 = vpack.c.b16 %v1953, %v1952
  %v1963 = vpack.c.b16 %v1955, %v1954
  %1972 = vmatprep.subr.bf16.mxu0 0
  %1973 = vmatpush1.bf16.msra.mxu0 %v1956
  %1974 = vmatprep.subr.bf16.mxu0 0
  %1975 = vmatpush1.bf16.msra.mxu0 %v1957
  %1976 = vmatprep.subr.bf16.mxu0 0
  %1977 = vmatpush1.bf16.msra.mxu0 %v1958
  %1978 = vmatprep.subr.bf16.mxu0 0
  %1979 = vmatpush1.bf16.msra.mxu0 %v1959
  %1980 = vmatprep.subr.bf16.mxu0 0
  %1981 = vmatpush1.bf16.msra.mxu0 %v1960
  %1982 = vmatprep.subr.bf16.mxu0 0
  %1983 = vmatpush1.bf16.msra.mxu0 %v1961
  %1984 = vmatprep.subr.bf16.mxu0 0
  %1985 = vmatpush1.bf16.msra.mxu0 %v1962
  %1986 = vmatprep.subr.bf16.mxu0 0
  %1987 = vmatpush1.bf16.msra.mxu0 %v1963
  %1988 = vmatprep.subr.bf16.mxu0 0
  %1989 = vmatpush1.bf16.msra.mxu0 0
  %1990 = vmatprep.subr.bf16.mxu0 0
  %1991 = vmatpush1.bf16.msra.mxu0 0
  %1992 = vmatprep.subr.bf16.mxu0 0
  %1993 = vmatpush1.bf16.msra.mxu0 0
  %1994 = vmatprep.subr.bf16.mxu0 0
  %1995 = vmatpush1.bf16.msra.mxu0 0
  %1996 = vmatprep.subr.bf16.mxu0 0
  %1997 = vmatpush1.bf16.msra.mxu0 0
  %1998 = vmatprep.subr.bf16.mxu0 0
  %1999 = vmatpush1.bf16.msra.mxu0 0
  %2000 = vmatprep.subr.bf16.mxu0 0
  %2001 = vmatpush1.bf16.msra.mxu0 0
  %2002 = vmatprep.subr.bf16.mxu0 0
  %2003 = vmatpush1.bf16.msra.mxu0 0
  %2004 = vmatprep.mubr.bf16.mxu0 0
  %2005 = vmatmul.mubr.bf16.gmra.mrb[0].mxu0 %v1797
  %v2006 = vpop.f32.mrb[0].mxu0
  %v2007 = vadd.f32 %v1919, %v2006
  %v2008 = vpop.f32.mrb[0].mxu0
  %v2009 = vpop.f32.mrb[0].mxu0
  %v2010 = vpop.f32.mrb[0].mxu0
  %2011 = vdwg.mxu0
  %s2012 = scalar_lea.vmem %s2, 576
  %v2013 = vld [vmem:[%s2012] sm:$0xf]
  %v2014 = vld [vmem:[%s2012 + $0x4] sm:$0xf]
  %v2015 = vld [vmem:[%s2012 + $0x8] sm:$0xf]
  %v2016 = vld [vmem:[%s2012 + $0xc] sm:$0xf]
  %v2017 = vld [vmem:[%s2012 + $0x10] sm:$0xf]
  %v2018 = vld [vmem:[%s2012 + $0x14] sm:$0xf]
  %v2019 = vld [vmem:[%s2012 + $0x18] sm:$0xf]
  %v2020 = vld [vmem:[%s2012 + $0x1c] sm:$0xf]
  %v2021 = vld [vmem:[%s2012 + $0x20] sm:$0xf]
  %v2022 = vld [vmem:[%s2012 + $0x24] sm:$0xf]
  %v2023 = vld [vmem:[%s2012 + $0x28] sm:$0xf]
  %v2024 = vld [vmem:[%s2012 + $0x2c] sm:$0xf]
  %v2025 = vld [vmem:[%s2012 + $0x30] sm:$0xf]
  %v2026 = vld [vmem:[%s2012 + $0x34] sm:$0xf]
  %v2027 = vld [vmem:[%s2012 + $0x38] sm:$0xf]
  %v2028 = vld [vmem:[%s2012 + $0x3c] sm:$0xf]
  %v2045 = vunpack.c.l.b16 %v2013
  %v2046 = vunpack.c.l.b16 %v2014
  %v2047 = vunpack.c.l.b16 %v2015
  %v2048 = vunpack.c.l.b16 %v2016
  %v2049 = vunpack.c.l.b16 %v2017
  %v2050 = vunpack.c.l.b16 %v2018
  %v2051 = vunpack.c.l.b16 %v2019
  %v2052 = vunpack.c.l.b16 %v2020
  %v2053 = vunpack.c.l.b16 %v2021
  %v2054 = vunpack.c.l.b16 %v2022
  %v2055 = vunpack.c.l.b16 %v2023
  %v2056 = vunpack.c.l.b16 %v2024
  %v2057 = vunpack.c.l.b16 %v2025
  %v2058 = vunpack.c.l.b16 %v2026
  %v2059 = vunpack.c.l.b16 %v2027
  %v2060 = vunpack.c.l.b16 %v2028
  %v2061 = vpack.c.b16 %v2046, %v2045
  %v2062 = vpack.c.b16 %v2048, %v2047
  %v2063 = vpack.c.b16 %v2050, %v2049
  %v2064 = vpack.c.b16 %v2052, %v2051
  %v2065 = vpack.c.b16 %v2054, %v2053
  %v2066 = vpack.c.b16 %v2056, %v2055
  %v2067 = vpack.c.b16 %v2058, %v2057
  %v2068 = vpack.c.b16 %v2060, %v2059
  %2077 = vmatprep.subr.bf16.mxu0 0
  %2078 = vmatpush1.bf16.msra.mxu0 %v2061
  %2079 = vmatprep.subr.bf16.mxu0 0
  %2080 = vmatpush1.bf16.msra.mxu0 %v2062
  %2081 = vmatprep.subr.bf16.mxu0 0
  %2082 = vmatpush1.bf16.msra.mxu0 %v2063
  %2083 = vmatprep.subr.bf16.mxu0 0
  %2084 = vmatpush1.bf16.msra.mxu0 %v2064
  %2085 = vmatprep.subr.bf16.mxu0 0
  %2086 = vmatpush1.bf16.msra.mxu0 %v2065
  %2087 = vmatprep.subr.bf16.mxu0 0
  %2088 = vmatpush1.bf16.msra.mxu0 %v2066
  %2089 = vmatprep.subr.bf16.mxu0 0
  %2090 = vmatpush1.bf16.msra.mxu0 %v2067
  %2091 = vmatprep.subr.bf16.mxu0 0
  %2092 = vmatpush1.bf16.msra.mxu0 %v2068
  %2093 = vmatprep.subr.bf16.mxu0 0
  %2094 = vmatpush1.bf16.msra.mxu0 0
  %2095 = vmatprep.subr.bf16.mxu0 0
  %2096 = vmatpush1.bf16.msra.mxu0 0
  %2097 = vmatprep.subr.bf16.mxu0 0
  %2098 = vmatpush1.bf16.msra.mxu0 0
  %2099 = vmatprep.subr.bf16.mxu0 0
  %2100 = vmatpush1.bf16.msra.mxu0 0
  %2101 = vmatprep.subr.bf16.mxu0 0
  %2102 = vmatpush1.bf16.msra.mxu0 0
  %2103 = vmatprep.subr.bf16.mxu0 0
  %2104 = vmatpush1.bf16.msra.mxu0 0
  %2105 = vmatprep.subr.bf16.mxu0 0
  %2106 = vmatpush1.bf16.msra.mxu0 0
  %2107 = vmatprep.subr.bf16.mxu0 0
  %2108 = vmatpush1.bf16.msra.mxu0 0
  %2109 = vmatprep.mubr.bf16.mxu0 0
  %2110 = vmatmul.mubr.bf16.gmra.mrb[0].mxu0 %v1798
  %v2111 = vpop.f32.mrb[0].mxu0
  %v2112 = vadd.f32 0.0, %v2111
  %v2113 = vpop.f32.mrb[0].mxu0
  %v2114 = vpop.f32.mrb[0].mxu0
  %v2115 = vpop.f32.mrb[0].mxu0
  %2116 = vdwg.mxu0
  %v2117 = vadd.f32 %v2007, %v2112
  %s2118 = scalar_lea.vmem %s2, 640
  %v2119 = vld [vmem:[%s2118] sm:$0xf]
  %v2120 = vld [vmem:[%s2118 + $0x4] sm:$0xf]
  %v2121 = vld [vmem:[%s2118 + $0x8] sm:$0xf]
  %v2122 = vld [vmem:[%s2118 + $0xc] sm:$0xf]
  %v2123 = vld [vmem:[%s2118 + $0x10] sm:$0xf]
  %v2124 = vld [vmem:[%s2118 + $0x14] sm:$0xf]
  %v2125 = vld [vmem:[%s2118 + $0x18] sm:$0xf]
  %v2126 = vld [vmem:[%s2118 + $0x1c] sm:$0xf]
  %v2127 = vld [vmem:[%s2118 + $0x20] sm:$0xf]
  %v2128 = vld [vmem:[%s2118 + $0x24] sm:$0xf]
  %v2129 = vld [vmem:[%s2118 + $0x28] sm:$0xf]
  %v2130 = vld [vmem:[%s2118 + $0x2c] sm:$0xf]
  %v2131 = vld [vmem:[%s2118 + $0x30] sm:$0xf]
  %v2132 = vld [vmem:[%s2118 + $0x34] sm:$0xf]
  %v2133 = vld [vmem:[%s2118 + $0x38] sm:$0xf]
  %v2134 = vld [vmem:[%s2118 + $0x3c] sm:$0xf]
  %v2136 = vrot.slane %v1798, 4
  %v2154 = vunpack.c.l.b16 %v2119
  %v2155 = vunpack.c.l.b16 %v2120
  %v2156 = vunpack.c.l.b16 %v2121
  %v2157 = vunpack.c.l.b16 %v2122
  %v2158 = vunpack.c.l.b16 %v2123
  %v2159 = vunpack.c.l.b16 %v2124
  %v2160 = vunpack.c.l.b16 %v2125
  %v2161 = vunpack.c.l.b16 %v2126
  %v2162 = vunpack.c.l.b16 %v2127
  %v2163 = vunpack.c.l.b16 %v2128
  %v2164 = vunpack.c.l.b16 %v2129
  %v2165 = vunpack.c.l.b16 %v2130
  %v2166 = vunpack.c.l.b16 %v2131
  %v2167 = vunpack.c.l.b16 %v2132
  %v2168 = vunpack.c.l.b16 %v2133
  %v2169 = vunpack.c.l.b16 %v2134
  %v2170 = vpack.c.b16 %v2155, %v2154
  %v2171 = vpack.c.b16 %v2157, %v2156
  %v2172 = vpack.c.b16 %v2159, %v2158
  %v2173 = vpack.c.b16 %v2161, %v2160
  %v2174 = vpack.c.b16 %v2163, %v2162
  %v2175 = vpack.c.b16 %v2165, %v2164
  %v2176 = vpack.c.b16 %v2167, %v2166
  %v2177 = vpack.c.b16 %v2169, %v2168
  %2186 = vmatprep.subr.bf16.mxu0 0
  %2187 = vmatpush1.bf16.msra.mxu0 %v2170
  %2188 = vmatprep.subr.bf16.mxu0 0
  %2189 = vmatpush1.bf16.msra.mxu0 %v2171
  %2190 = vmatprep.subr.bf16.mxu0 0
  %2191 = vmatpush1.bf16.msra.mxu0 %v2172
  %2192 = vmatprep.subr.bf16.mxu0 0
  %2193 = vmatpush1.bf16.msra.mxu0 %v2173
  %2194 = vmatprep.subr.bf16.mxu0 0
  %2195 = vmatpush1.bf16.msra.mxu0 %v2174
  %2196 = vmatprep.subr.bf16.mxu0 0
  %2197 = vmatpush1.bf16.msra.mxu0 %v2175
  %2198 = vmatprep.subr.bf16.mxu0 0
  %2199 = vmatpush1.bf16.msra.mxu0 %v2176
  %2200 = vmatprep.subr.bf16.mxu0 0
  %2201 = vmatpush1.bf16.msra.mxu0 %v2177
  %2202 = vmatprep.subr.bf16.mxu0 0
  %2203 = vmatpush1.bf16.msra.mxu0 0
  %2204 = vmatprep.subr.bf16.mxu0 0
  %2205 = vmatpush1.bf16.msra.mxu0 0
  %2206 = vmatprep.subr.bf16.mxu0 0
  %2207 = vmatpush1.bf16.msra.mxu0 0
  %2208 = vmatprep.subr.bf16.mxu0 0
  %2209 = vmatpush1.bf16.msra.mxu0 0
  %2210 = vmatprep.subr.bf16.mxu0 0
  %2211 = vmatpush1.bf16.msra.mxu0 0
  %2212 = vmatprep.subr.bf16.mxu0 0
  %2213 = vmatpush1.bf16.msra.mxu0 0
  %2214 = vmatprep.subr.bf16.mxu0 0
  %2215 = vmatpush1.bf16.msra.mxu0 0
  %2216 = vmatprep.subr.bf16.mxu0 0
  %2217 = vmatpush1.bf16.msra.mxu0 0
  %2218 = vmatprep.mubr.bf16.mxu0 0
  %2219 = vmatmul.mubr.bf16.gmra.mrb[0].mxu0 %v2136
  %v2220 = vpop.f32.mrb[0].mxu0
  %v2221 = vadd.f32 0.0, %v2220
  %v2222 = vpop.f32.mrb[0].mxu0
  %v2223 = vpop.f32.mrb[0].mxu0
  %v2224 = vpop.f32.mrb[0].mxu0
  %2225 = vdwg.mxu0
  %v2226 = vadd.f32 %v2117, %v2221
  %s2227 = scalar_lea.vmem %s5, 2
  %v2228 = vld [vmem:[%s2227] sm:$0x1]
  %v2230 = vlaneseq
  %v2231 = vshrl.u32 %v2230, 7
  %v2232 = vsub.s32 0, %v2231
  %v2233 = vrot.slane %v2228, %v2232
  %v2235 = vadd.f32 %v2226, %v2233
  %v2236 = vmax.f32 %v2235, 0.0
  %v2237 = vpack.c.bf16 %v2236, %v2236
  %s2238 = scalar_lea.vmem %s2, 704
  %v2239 = vld [vmem:[%s2238] sm:$0xf]
  %v2240 = vld [vmem:[%s2238 + $0x4] sm:$0xf]
  %v2241 = vld [vmem:[%s2238 + $0x8] sm:$0xf]
  %v2242 = vld [vmem:[%s2238 + $0xc] sm:$0xf]
  %v2243 = vld [vmem:[%s2238 + $0x10] sm:$0xf]
  %v2244 = vld [vmem:[%s2238 + $0x14] sm:$0xf]
  %v2245 = vld [vmem:[%s2238 + $0x18] sm:$0xf]
  %v2246 = vld [vmem:[%s2238 + $0x1c] sm:$0xf]
  %v2247 = vld [vmem:[%s2238 + $0x20] sm:$0xf]
  %v2248 = vld [vmem:[%s2238 + $0x24] sm:$0xf]
  %v2249 = vld [vmem:[%s2238 + $0x28] sm:$0xf]
  %v2250 = vld [vmem:[%s2238 + $0x2c] sm:$0xf]
  %v2251 = vld [vmem:[%s2238 + $0x30] sm:$0xf]
  %v2252 = vld [vmem:[%s2238 + $0x34] sm:$0xf]
  %v2253 = vld [vmem:[%s2238 + $0x38] sm:$0xf]
  %v2254 = vld [vmem:[%s2238 + $0x3c] sm:$0xf]
  %s2255 = scalar_lea.vmem %s5, 3
  %v2256 = vld [vmem:[%s2255] sm:$0x1]
  %v2258 = vlaneseq
  %v2259 = vshrl.u32 %v2258, 7
  %v2260 = vsub.s32 0, %v2259
  %v2261 = vrot.slane %v2256, %v2260
  %v2279 = vunpack.c.l.b16 %v2239
  %v2280 = vunpack.c.l.b16 %v2240
  %v2281 = vunpack.c.l.b16 %v2241
  %v2282 = vunpack.c.l.b16 %v2242
  %v2283 = vunpack.c.l.b16 %v2243
  %v2284 = vunpack.c.l.b16 %v2244
  %v2285 = vunpack.c.l.b16 %v2245
  %v2286 = vunpack.c.l.b16 %v2246
  %v2287 = vunpack.c.l.b16 %v2247
  %v2288 = vunpack.c.l.b16 %v2248
  %v2289 = vunpack.c.l.b16 %v2249
  %v2290 = vunpack.c.l.b16 %v2250
  %v2291 = vunpack.c.l.b16 %v2251
  %v2292 = vunpack.c.l.b16 %v2252
  %v2293 = vunpack.c.l.b16 %v2253
  %v2294 = vunpack.c.l.b16 %v2254
  %v2295 = vpack.c.b16 %v2280, %v2279
  %v2296 = vpack.c.b16 %v2282, %v2281
  %v2297 = vpack.c.b16 %v2284, %v2283
  %v2298 = vpack.c.b16 %v2286, %v2285
  %v2299 = vpack.c.b16 %v2288, %v2287
  %v2300 = vpack.c.b16 %v2290, %v2289
  %v2301 = vpack.c.b16 %v2292, %v2291
  %v2302 = vpack.c.b16 %v2294, %v2293
  %2311 = vmatprep.subr.bf16.mxu0 0
  %2312 = vmatpush1.bf16.msra.mxu0 %v2295
  %2313 = vmatprep.subr.bf16.mxu0 0
  %2314 = vmatpush1.bf16.msra.mxu0 %v2296
  %2315 = vmatprep.subr.bf16.mxu0 0
  %2316 = vmatpush1.bf16.msra.mxu0 %v2297
  %2317 = vmatprep.subr.bf16.mxu0 0
  %2318 = vmatpush1.bf16.msra.mxu0 %v2298
  %2319 = vmatprep.subr.bf16.mxu0 0
  %2320 = vmatpush1.bf16.msra.mxu0 %v2299
  %2321 = vmatprep.subr.bf16.mxu0 0
  %2322 = vmatpush1.bf16.msra.mxu0 %v2300
  %2323 = vmatprep.subr.bf16.mxu0 0
  %2324 = vmatpush1.bf16.msra.mxu0 %v2301
  %2325 = vmatprep.subr.bf16.mxu0 0
  %2326 = vmatpush1.bf16.msra.mxu0 %v2302
  %2327 = vmatprep.subr.bf16.mxu0 0
  %2328 = vmatpush1.bf16.msra.mxu0 0
  %2329 = vmatprep.subr.bf16.mxu0 0
  %2330 = vmatpush1.bf16.msra.mxu0 0
  %2331 = vmatprep.subr.bf16.mxu0 0
  %2332 = vmatpush1.bf16.msra.mxu0 0
  %2333 = vmatprep.subr.bf16.mxu0 0
  %2334 = vmatpush1.bf16.msra.mxu0 0
  %2335 = vmatprep.subr.bf16.mxu0 0
  %2336 = vmatpush1.bf16.msra.mxu0 0
  %2337 = vmatprep.subr.bf16.mxu0 0
  %2338 = vmatpush1.bf16.msra.mxu0 0
  %2339 = vmatprep.subr.bf16.mxu0 0
  %2340 = vmatpush1.bf16.msra.mxu0 0
  %2341 = vmatprep.subr.bf16.mxu0 0
  %2342 = vmatpush1.bf16.msra.mxu0 0
  %2343 = vmatprep.mubr.bf16.mxu0 0
  %2344 = vmatmul.mubr.bf16.gmra.mrb[0].mxu0 %v2237
  %v2345 = vpop.f32.mrb[0].mxu0
  %v2346 = vadd.f32 %v2261, %v2345
  %v2347 = vpop.f32.mrb[0].mxu0
  %v2348 = vpop.f32.mrb[0].mxu0
  %v2349 = vpop.f32.mrb[0].mxu0
  %2350 = vdwg.mxu0
  %2351 = vst [vmem:[%s6] sm:$0xff] %v2346
  // Predicated region
  $region26: #{da_model_forward.1} parent=0 // pred_check
    _
  $region27: #{da_model_forward.1} parent=0 // pred_check_branch
    %2353 = sbr.rel (0) target = $region29
  $region28: #{da_model_forward.1} parent=0 // pred_region
    _
  $region29: #{da_model_forward.1} parent=0 // pred_fallthru
    _
  // Predicated region
  $region30: #{da_model_forward.1} parent=0 // pred_check
    _
  $region31: #{da_model_forward.1} parent=0 // pred_check_branch
    %2355 = sbr.rel (0) target = $region33
  $region32: #{da_model_forward.1} parent=0 // pred_region
    _
  $region33: #{da_model_forward.1} parent=0 // pred_fallthru
    _

</llo_original>
